<compile_context>
chip_gen: v7x
topology: tpu7x:2x2x1
jax: 0.10.0
libtpu: 0.0.40
codegen_flags: <defaults>
</compile_context>

<pallas_src>
import functools

import jax
import jax.numpy as jnp
from jax.experimental import pallas as pl
from jax.experimental.pallas import tpu as pltpu


# ----------------------------- kernel helpers ------------------------------
def _layernorm(x, gamma, beta, eps=1e-5):
    mean = jnp.mean(x, axis=-1, keepdims=True)
    var = jnp.mean((x - mean) ** 2, axis=-1, keepdims=True)
    return (x - mean) * jax.lax.rsqrt(var + eps) * gamma + beta


def _gelu(x):
    # exact GELU (matches torch.nn.GELU default)
    return 0.5 * x * (1.0 + jax.lax.erf(x * (1.0 / jnp.sqrt(2.0)).astype(x.dtype)))


# ------------------------------ Pallas kernel ------------------------------
def encoder_kernel(x_ref, g1_ref, b1_ref, wq_ref, wk_ref, wv_ref, wproj_ref, bproj_ref,
                   g2_ref, b2_ref, w1_ref, b1m_ref, w2_ref, b2m_ref, o_ref,
                   x_acc, *, num_heads, scale):
    """One (batch b, layer l) grid step:  x <- x + Attn(LN(x));  x <- x + MLP(LN(x))."""
    l = pl.program_id(1)
    last = pl.num_programs(1) - 1

    # Load the input activation into the resident fp32 accumulator at the first layer.
    @pl.when(l == 0)
    def _():
        x_acc[...] = x_ref[...].astype(jnp.float32)

    x = x_acc[...]                                   # (N, C) fp32, resident across layers
    dims_nt = (((1,), (1,)), ((), ()))               # q @ k^T without materializing a transpose

    # ---- attention branch (pre-norm) ----
    xn = _layernorm(x, g1_ref[...], b1_ref[...])     # fp32
    xn_b = xn.astype(jnp.bfloat16)                   # bf16 MXU operand

    attn_out = jnp.zeros_like(x)
    for h in range(num_heads):                       # heads combined on the MXU (no lane concat)
        q = jnp.dot(xn_b, wq_ref[h], preferred_element_type=jnp.float32)      # (N, d)
        k = jnp.dot(xn_b, wk_ref[h], preferred_element_type=jnp.float32)      # (N, d)
        v = jnp.dot(xn_b, wv_ref[h], preferred_element_type=jnp.float32)      # (N, d)
        s = jax.lax.dot_general(q.astype(jnp.bfloat16), k.astype(jnp.bfloat16),
                                dims_nt, preferred_element_type=jnp.float32) * scale
        s = s - jnp.max(s, axis=-1, keepdims=True)
        p = jnp.exp(s)
        p = p * pl.reciprocal(jnp.sum(p, axis=-1, keepdims=True), approx=True)  # EUP vrcp
        ctx = jnp.dot(p.astype(jnp.bfloat16), v.astype(jnp.bfloat16),
                      preferred_element_type=jnp.float32)                       # (N, d)
        attn_out = attn_out + jnp.dot(ctx.astype(jnp.bfloat16), wproj_ref[h],
                                      preferred_element_type=jnp.float32)       # (N, C)
    x = x + attn_out + bproj_ref[...]

    # ---- MLP branch (pre-norm) ----
    xn2 = _layernorm(x, g2_ref[...], b2_ref[...])
    hdn = _gelu(jnp.dot(xn2.astype(jnp.bfloat16), w1_ref[...],
                        preferred_element_type=jnp.float32) + b1m_ref[...])
    x = x + jnp.dot(hdn.astype(jnp.bfloat16), w2_ref[...],
                    preferred_element_type=jnp.float32) + b2m_ref[...]

    x_acc[...] = x

    @pl.when(l == last)
    def _():
        o_ref[...] = x.astype(o_ref.dtype)


# ------------------------------- wrappers ----------------------------------
def prepare_params(all_block_params, num_heads):
    """Stack per-layer params along depth; split qkv/proj weights per head; bf16 MXU weights."""
    stacked = [jnp.stack(t) for t in zip(*all_block_params)]
    (g1, b1, wqkv, wproj, bproj, g2, b2, w1, b1m, w2, b2m) = stacked
    depth, C, _ = wqkv.shape
    H = num_heads
    d = C // H

    # Column layout of wqkv follows the reference reshape (..., 3, H, d): q|k|v blocks, head-major.
    wq = wqkv[:, :, 0 * C:1 * C].reshape(depth, C, H, d).transpose(0, 2, 1, 3)   # (depth,H,C,d)
    wk = wqkv[:, :, 1 * C:2 * C].reshape(depth, C, H, d).transpose(0, 2, 1, 3)
    wv = wqkv[:, :, 2 * C:3 * C].reshape(depth, C, H, d).transpose(0, 2, 1, 3)
    wproj_h = wproj.reshape(depth, H, d, C)                                      # (depth,H,d,C)

    bf16 = lambda a: a.astype(jnp.bfloat16)          # MXU operands only
    row = lambda a: a[:, None, :]                    # (depth, F) -> (depth, 1, F) lane rows (fp32)
    return (row(g1), row(b1), bf16(wq), bf16(wk), bf16(wv), bf16(wproj_h), row(bproj),
            row(g2), row(b2), bf16(w1), row(b1m), bf16(w2), row(b2m))


def _layer_spec(a):
    """Per-layer weight block: squeeze the leading depth dim, index it by the layer grid coord."""
    zeros = (0,) * (a.ndim - 1)
    return pl.BlockSpec((None,) + tuple(a.shape[1:]), lambda b, l, z=zeros: (l,) + z)


def point_transformer_encoder(x, all_block_params, num_heads):
    B, N, C = x.shape
    depth = len(all_block_params)
    d = C // num_heads
    params = prepare_params(all_block_params, num_heads)

    kern = functools.partial(encoder_kernel, num_heads=num_heads, scale=float(d) ** (-0.5))
    x_spec = pl.BlockSpec((None, N, C), lambda b, l: (b, 0, 0))

    out = pl.pallas_call(
        kern,
        out_shape=jax.ShapeDtypeStruct((B, N, C), x.dtype),
        grid_spec=pltpu.PrefetchScalarGridSpec(
            num_scalar_prefetch=0,
            grid=(B, depth),
            in_specs=[x_spec] + [_layer_spec(p) for p in params],
            out_specs=x_spec,
            scratch_shapes=[pltpu.VMEM((N, C), jnp.float32)],
        ),
        compiler_params=pltpu.CompilerParams(
            dimension_semantics=("parallel", "arbitrary"),
            vmem_limit_bytes=48 * 1024 * 1024,
        ),
    )(x, *params)
    return out


# ------------------------- parameter initialization ------------------------
def init_block_params(key, dim, mlp_hidden):
    ks = jax.random.split(key, 8)
    g1 = 1.0 + 0.01 * jax.random.normal(ks[0], (dim,), jnp.float32)
    b1 = 0.01 * jax.random.normal(ks[1], (dim,), jnp.float32)
    wqkv = 0.02 * jax.random.normal(ks[2], (dim, 3 * dim), jnp.float32)      # qkv_bias=False
    wproj = 0.02 * jax.random.normal(ks[3], (dim, dim), jnp.float32)
    bproj = 0.01 * jax.random.normal(ks[4], (dim,), jnp.float32)
    g2 = 1.0 + 0.01 * jax.random.normal(ks[5], (dim,), jnp.float32)
    b2 = 0.01 * jax.random.normal(ks[6], (dim,), jnp.float32)
    kw1, kw2, kb1, kb2 = jax.random.split(ks[7], 4)
    w1 = 0.02 * jax.random.normal(kw1, (dim, mlp_hidden), jnp.float32)
    b1m = 0.01 * jax.random.normal(kb1, (mlp_hidden,), jnp.float32)
    w2 = 0.02 * jax.random.normal(kw2, (mlp_hidden, dim), jnp.float32)
    b2m = 0.01 * jax.random.normal(kb2, (dim,), jnp.float32)
    return (g1, b1, wqkv, wproj, bproj, g2, b2, w1, b1m, w2, b2m)


# ------------------------------ pure-JAX reference --------------------------
def block_ref(x, params, num_heads):
    (g1, b1, wqkv, wproj, bproj, g2, b2, w1, b1m, w2, b2m) = params
    B, N, C = x.shape
    d = C // num_heads
    scale = d ** (-0.5)

    xn = _layernorm(x, g1, b1)
    qkv = xn @ wqkv                                        # (B, N, 3C)
    qkv = qkv.reshape(B, N, 3, num_heads, d).transpose(2, 0, 3, 1, 4)
    q, k, v = qkv[0], qkv[1], qkv[2]                       # (B, H, N, d)
    attn = jnp.einsum("bhnd,bhmd->bhnm", q, k) * scale
    attn = jax.nn.softmax(attn, axis=-1)
    ao = jnp.einsum("bhnm,bhmd->bhnd", attn, v).transpose(0, 2, 1, 3).reshape(B, N, C)
    x = x + (ao @ wproj + bproj)

    xn2 = _layernorm(x, g2, b2)
    h = _gelu(xn2 @ w1 + b1m)
    return x + (h @ w2 + b2m)


def encoder_ref(x, all_block_params, num_heads):
    for params in all_block_params:
        x = block_ref(x, params, num_heads)
    return x


# ----------------------------------- main -----------------------------------
if __name__ == "__main__":
    B, N, C = 2, 8, 32          # batch, tokens, embed_dim
    num_heads = 4
    mlp_ratio = 2.0
    depth = 2
    mlp_hidden = int(C * mlp_ratio)

    key = jax.random.PRNGKey(0)
    kx, kp = jax.random.split(key)
    x = jax.random.normal(kx, (B, N, C), jnp.float32)

    block_keys = jax.random.split(kp, depth)
    all_params = [init_block_params(block_keys[i], C, mlp_hidden) for i in range(depth)]

    out = point_transformer_encoder(x, all_params, num_heads)
    out = jax.block_until_ready(out)

    ref = encoder_ref(x, all_params, num_heads)
    err = float(jnp.max(jnp.abs(out - ref)))
    assert out.shape == (B, N, C)
    # bf16 MXU operands (fp32 accumulation) vs fp32 reference -> slightly relaxed tolerance.
    assert jnp.allclose(out, ref, atol=2e-3, rtol=2e-3), f"max abs err = {err}"

    print("KERNEL_OK")
</pallas_src>

<mosaic_0001>
module attributes {stable_mosaic.version = 11 : i64} {
  func.func @encoder_kernel(%arg0: i32, %arg1: i32, %arg2: memref<1x8x32xf32, #tpu.memory_space<vmem>>, %arg3: memref<1x1x32xf32, #tpu.memory_space<vmem>>, %arg4: memref<1x1x32xf32, #tpu.memory_space<vmem>>, %arg5: memref<1x4x32x8xbf16, #tpu.memory_space<vmem>>, %arg6: memref<1x4x32x8xbf16, #tpu.memory_space<vmem>>, %arg7: memref<1x4x32x8xbf16, #tpu.memory_space<vmem>>, %arg8: memref<1x4x8x32xbf16, #tpu.memory_space<vmem>>, %arg9: memref<1x1x32xf32, #tpu.memory_space<vmem>>, %arg10: memref<1x1x32xf32, #tpu.memory_space<vmem>>, %arg11: memref<1x1x32xf32, #tpu.memory_space<vmem>>, %arg12: memref<1x32x64xbf16, #tpu.memory_space<vmem>>, %arg13: memref<1x1x64xf32, #tpu.memory_space<vmem>>, %arg14: memref<1x64x32xbf16, #tpu.memory_space<vmem>>, %arg15: memref<1x1x32xf32, #tpu.memory_space<vmem>>, %arg16: memref<1x8x32xf32, #tpu.memory_space<vmem>>, %arg17: memref<8x32xf32, #tpu.memory_space<vmem>>) attributes {dimension_semantics = [#tpu.dimension_semantics<parallel>, #tpu.dimension_semantics<arbitrary>], iteration_bounds = array<i64: 2, 2>, scalar_prefetch = 0 : i64, scratch_operands = 1 : i64, tpu.core_type = #tpu.core_type<tc>, window_params = [{transform_indices = @transform_0, window_bounds = array<i64: 1, 8, 32>}, {transform_indices = @transform_1, window_bounds = array<i64: 1, 1, 32>}, {transform_indices = @transform_2, window_bounds = array<i64: 1, 1, 32>}, {transform_indices = @transform_3, window_bounds = array<i64: 1, 4, 32, 8>}, {transform_indices = @transform_4, window_bounds = array<i64: 1, 4, 32, 8>}, {transform_indices = @transform_5, window_bounds = array<i64: 1, 4, 32, 8>}, {transform_indices = @transform_6, window_bounds = array<i64: 1, 4, 8, 32>}, {transform_indices = @transform_7, window_bounds = array<i64: 1, 1, 32>}, {transform_indices = @transform_8, window_bounds = array<i64: 1, 1, 32>}, {transform_indices = @transform_9, window_bounds = array<i64: 1, 1, 32>}, {transform_indices = @transform_10, window_bounds = array<i64: 1, 32, 64>}, {transform_indices = @transform_11, window_bounds = array<i64: 1, 1, 64>}, {transform_indices = @transform_12, window_bounds = array<i64: 1, 64, 32>}, {transform_indices = @transform_13, window_bounds = array<i64: 1, 1, 32>}, {transform_indices = @transform_14, window_bounds = array<i64: 1, 8, 32>}]} {
    %c0_i32 = arith.constant 0 : i32
    %0 = arith.cmpi eq, %arg1, %c0_i32 : i32
    %1 = arith.extui %0 : i1 to i32
    %c0_i32_0 = arith.constant 0 : i32
    %2 = arith.cmpi ne, %1, %c0_i32_0 : i32
    scf.if %2 {
      %c0_145 = arith.constant 0 : index
      %c0_146 = arith.constant 0 : index
      %c0_147 = arith.constant 0 : index
      %222 = vector.load %arg2[%c0_145, %c0_146, %c0_147] : memref<1x8x32xf32, #tpu.memory_space<vmem>>, vector<1x8x32xf32>
      %223 = vector.shape_cast %222 : vector<1x8x32xf32> to vector<8x32xf32>
      %c0_148 = arith.constant 0 : index
      %c0_149 = arith.constant 0 : index
      %224 = vector.load %arg17[%c0_148, %c0_149] : memref<8x32xf32, #tpu.memory_space<vmem>>, vector<8x32xf32>
      tpu.vector_store %arg17[%c0_148, %c0_149], %223 {strides = array<i32>} : memref<8x32xf32, #tpu.memory_space<vmem>>, vector<8x32xf32>,
    } else {
    }
    %c0 = arith.constant 0 : index
    %c0_1 = arith.constant 0 : index
    %3 = vector.load %arg17[%c0, %c0_1] : memref<8x32xf32, #tpu.memory_space<vmem>>, vector<8x32xf32>
    %c0_2 = arith.constant 0 : index
    %c0_3 = arith.constant 0 : index
    %c0_4 = arith.constant 0 : index
    %4 = vector.load %arg3[%c0_2, %c0_3, %c0_4] : memref<1x1x32xf32, #tpu.memory_space<vmem>>, vector<1x1x32xf32>
    %5 = vector.shape_cast %4 : vector<1x1x32xf32> to vector<1x32xf32>
    %c0_5 = arith.constant 0 : index
    %c0_6 = arith.constant 0 : index
    %c0_7 = arith.constant 0 : index
    %6 = vector.load %arg4[%c0_5, %c0_6, %c0_7] : memref<1x1x32xf32, #tpu.memory_space<vmem>>, vector<1x1x32xf32>
    %7 = vector.shape_cast %6 : vector<1x1x32xf32> to vector<1x32xf32>
    %cst = arith.constant dense<0.000000e+00> : vector<8xf32>
    %8 = vector.multi_reduction <add>, %3, %cst [1] : vector<8x32xf32> to vector<8xf32>
    %9 = vector.shape_cast %8 : vector<8xf32> to vector<8x1xf32>
    %cst_8 = arith.constant 3.200000e+01 : f32
    %10 = vector.broadcast %cst_8 : f32 to vector<8x1xf32>
    %11 = arith.divf %9, %10 : vector<8x1xf32>
    %12 = vector.broadcast %11 : vector<8x1xf32> to vector<8x32xf32>
    %13 = arith.subf %3, %12 : vector<8x32xf32>
    %14 = arith.mulf %13, %13 : vector<8x32xf32>
    %cst_9 = arith.constant dense<0.000000e+00> : vector<8xf32>
    %15 = vector.multi_reduction <add>, %14, %cst_9 [1] : vector<8x32xf32> to vector<8xf32>
    %16 = vector.shape_cast %15 : vector<8xf32> to vector<8x1xf32>
    %cst_10 = arith.constant 3.200000e+01 : f32
    %17 = vector.broadcast %cst_10 : f32 to vector<8x1xf32>
    %18 = arith.divf %16, %17 : vector<8x1xf32>
    %19 = vector.broadcast %11 : vector<8x1xf32> to vector<8x32xf32>
    %20 = arith.subf %3, %19 : vector<8x32xf32>
    %cst_11 = arith.constant 9.99999974E-6 : f32
    %21 = vector.broadcast %cst_11 : f32 to vector<8x1xf32>
    %22 = arith.addf %18, %21 : vector<8x1xf32>
    %23 = math.rsqrt %22 : vector<8x1xf32>
    %24 = vector.broadcast %23 : vector<8x1xf32> to vector<8x32xf32>
    %25 = arith.mulf %20, %24 : vector<8x32xf32>
    %26 = vector.broadcast %5 : vector<1x32xf32> to vector<8x32xf32>
    %27 = arith.mulf %25, %26 : vector<8x32xf32>
    %28 = vector.broadcast %7 : vector<1x32xf32> to vector<8x32xf32>
    %29 = arith.addf %27, %28 : vector<8x32xf32>
    %30 = arith.truncf %29 : vector<8x32xf32> to vector<8x32xbf16>
    %cst_12 = arith.constant 0.000000e+00 : f32
    %31 = vector.broadcast %cst_12 : f32 to vector<8x32xf32>
    %c0_13 = arith.constant 0 : index
    %c0_14 = arith.constant 0 : index
    %c0_15 = arith.constant 0 : index
    %c0_16 = arith.constant 0 : index
    %32 = vector.load %arg5[%c0_13, %c0_14, %c0_15, %c0_16] : memref<1x4x32x8xbf16, #tpu.memory_space<vmem>>, vector<1x1x32x8xbf16>
    %33 = vector.shape_cast %32 : vector<1x1x32x8xbf16> to vector<32x8xbf16>
    %cst_17 = arith.constant dense<0.000000e+00> : vector<8x8xf32>
    %34 = tpu.matmul %30, %33, %cst_17 {dimension_numbers = #tpu.dot_dimension_numbers<[1], [0], [0], [1], [0, 0, 1, 1], [], []>} : vector<8x32xbf16>, vector<32x8xbf16>, vector<8x8xf32> -> vector<8x8xf32>
    %c0_18 = arith.constant 0 : index
    %c0_19 = arith.constant 0 : index
    %c0_20 = arith.constant 0 : index
    %c0_21 = arith.constant 0 : index
    %35 = vector.load %arg6[%c0_18, %c0_19, %c0_20, %c0_21] : memref<1x4x32x8xbf16, #tpu.memory_space<vmem>>, vector<1x1x32x8xbf16>
    %36 = vector.shape_cast %35 : vector<1x1x32x8xbf16> to vector<32x8xbf16>
    %cst_22 = arith.constant dense<0.000000e+00> : vector<8x8xf32>
    %37 = tpu.matmul %30, %36, %cst_22 {dimension_numbers = #tpu.dot_dimension_numbers<[1], [0], [0], [1], [0, 0, 1, 1], [], []>} : vector<8x32xbf16>, vector<32x8xbf16>, vector<8x8xf32> -> vector<8x8xf32>
    %c0_23 = arith.constant 0 : index
    %c0_24 = arith.constant 0 : index
    %c0_25 = arith.constant 0 : index
    %c0_26 = arith.constant 0 : index
    %38 = vector.load %arg7[%c0_23, %c0_24, %c0_25, %c0_26] : memref<1x4x32x8xbf16, #tpu.memory_space<vmem>>, vector<1x1x32x8xbf16>
    %39 = vector.shape_cast %38 : vector<1x1x32x8xbf16> to vector<32x8xbf16>
    %cst_27 = arith.constant dense<0.000000e+00> : vector<8x8xf32>
    %40 = tpu.matmul %30, %39, %cst_27 {dimension_numbers = #tpu.dot_dimension_numbers<[1], [0], [0], [1], [0, 0, 1, 1], [], []>} : vector<8x32xbf16>, vector<32x8xbf16>, vector<8x8xf32> -> vector<8x8xf32>
    %41 = arith.truncf %34 : vector<8x8xf32> to vector<8x8xbf16>
    %42 = arith.truncf %37 : vector<8x8xf32> to vector<8x8xbf16>
    %cst_28 = arith.constant dense<0.000000e+00> : vector<8x8xf32>
    %43 = tpu.matmul %41, %42, %cst_28 {dimension_numbers = #tpu.dot_dimension_numbers<[1], [1], [0], [0], [0, 0, 1, 0], [], []>} : vector<8x8xbf16>, vector<8x8xbf16>, vector<8x8xf32> -> vector<8x8xf32>
    %cst_29 = arith.constant 0.353553385 : f32
    %44 = vector.broadcast %cst_29 : f32 to vector<8x8xf32>
    %45 = arith.mulf %43, %44 : vector<8x8xf32>
    %cst_30 = arith.constant dense<0xFF800000> : vector<8xf32>
    %46 = vector.multi_reduction <maximumf>, %45, %cst_30 [1] : vector<8x8xf32> to vector<8xf32>
    %47 = vector.shape_cast %46 : vector<8xf32> to vector<8x1xf32>
    %48 = vector.broadcast %47 : vector<8x1xf32> to vector<8x8xf32>
    %49 = arith.subf %45, %48 : vector<8x8xf32>
    %50 = math.exp %49 : vector<8x8xf32>
    %cst_31 = arith.constant dense<0.000000e+00> : vector<8xf32>
    %51 = vector.multi_reduction <add>, %50, %cst_31 [1] : vector<8x8xf32> to vector<8xf32>
    %52 = vector.shape_cast %51 : vector<8xf32> to vector<8x1xf32>
    %53 = tpu.reciprocal %52 {approx = true} : vector<8x1xf32> -> vector<8x1xf32>
    %54 = vector.broadcast %53 : vector<8x1xf32> to vector<8x8xf32>
    %55 = arith.mulf %50, %54 : vector<8x8xf32>
    %56 = arith.truncf %55 : vector<8x8xf32> to vector<8x8xbf16>
    %57 = arith.truncf %40 : vector<8x8xf32> to vector<8x8xbf16>
    %cst_32 = arith.constant dense<0.000000e+00> : vector<8x8xf32>
    %58 = tpu.matmul %56, %57, %cst_32 {dimension_numbers = #tpu.dot_dimension_numbers<[1], [0], [0], [1], [0, 0, 1, 1], [], []>} : vector<8x8xbf16>, vector<8x8xbf16>, vector<8x8xf32> -> vector<8x8xf32>
    %59 = arith.truncf %58 : vector<8x8xf32> to vector<8x8xbf16>
    %c0_33 = arith.constant 0 : index
    %c0_34 = arith.constant 0 : index
    %c0_35 = arith.constant 0 : index
    %c0_36 = arith.constant 0 : index
    %60 = vector.load %arg8[%c0_33, %c0_34, %c0_35, %c0_36] : memref<1x4x8x32xbf16, #tpu.memory_space<vmem>>, vector<1x1x8x32xbf16>
    %61 = vector.shape_cast %60 : vector<1x1x8x32xbf16> to vector<8x32xbf16>
    %cst_37 = arith.constant dense<0.000000e+00> : vector<8x32xf32>
    %62 = tpu.matmul %59, %61, %cst_37 {dimension_numbers = #tpu.dot_dimension_numbers<[1], [0], [0], [1], [0, 0, 1, 1], [], []>} : vector<8x8xbf16>, vector<8x32xbf16>, vector<8x32xf32> -> vector<8x32xf32>
    %63 = arith.addf %31, %62 : vector<8x32xf32>
    %c0_38 = arith.constant 0 : index
    %c1 = arith.constant 1 : index
    %c0_39 = arith.constant 0 : index
    %c0_40 = arith.constant 0 : index
    %64 = vector.load %arg5[%c0_38, %c1, %c0_39, %c0_40] : memref<1x4x32x8xbf16, #tpu.memory_space<vmem>>, vector<1x1x32x8xbf16>
    %65 = vector.shape_cast %64 : vector<1x1x32x8xbf16> to vector<32x8xbf16>
    %cst_41 = arith.constant dense<0.000000e+00> : vector<8x8xf32>
    %66 = tpu.matmul %30, %65, %cst_41 {dimension_numbers = #tpu.dot_dimension_numbers<[1], [0], [0], [1], [0, 0, 1, 1], [], []>} : vector<8x32xbf16>, vector<32x8xbf16>, vector<8x8xf32> -> vector<8x8xf32>
    %c0_42 = arith.constant 0 : index
    %c1_43 = arith.constant 1 : index
    %c0_44 = arith.constant 0 : index
    %c0_45 = arith.constant 0 : index
    %67 = vector.load %arg6[%c0_42, %c1_43, %c0_44, %c0_45] : memref<1x4x32x8xbf16, #tpu.memory_space<vmem>>, vector<1x1x32x8xbf16>
    %68 = vector.shape_cast %67 : vector<1x1x32x8xbf16> to vector<32x8xbf16>
    %cst_46 = arith.constant dense<0.000000e+00> : vector<8x8xf32>
    %69 = tpu.matmul %30, %68, %cst_46 {dimension_numbers = #tpu.dot_dimension_numbers<[1], [0], [0], [1], [0, 0, 1, 1], [], []>} : vector<8x32xbf16>, vector<32x8xbf16>, vector<8x8xf32> -> vector<8x8xf32>
    %c0_47 = arith.constant 0 : index
    %c1_48 = arith.constant 1 : index
    %c0_49 = arith.constant 0 : index
    %c0_50 = arith.constant 0 : index
    %70 = vector.load %arg7[%c0_47, %c1_48, %c0_49, %c0_50] : memref<1x4x32x8xbf16, #tpu.memory_space<vmem>>, vector<1x1x32x8xbf16>
    %71 = vector.shape_cast %70 : vector<1x1x32x8xbf16> to vector<32x8xbf16>
    %cst_51 = arith.constant dense<0.000000e+00> : vector<8x8xf32>
    %72 = tpu.matmul %30, %71, %cst_51 {dimension_numbers = #tpu.dot_dimension_numbers<[1], [0], [0], [1], [0, 0, 1, 1], [], []>} : vector<8x32xbf16>, vector<32x8xbf16>, vector<8x8xf32> -> vector<8x8xf32>
    %73 = arith.truncf %66 : vector<8x8xf32> to vector<8x8xbf16>
    %74 = arith.truncf %69 : vector<8x8xf32> to vector<8x8xbf16>
    %cst_52 = arith.constant dense<0.000000e+00> : vector<8x8xf32>
    %75 = tpu.matmul %73, %74, %cst_52 {dimension_numbers = #tpu.dot_dimension_numbers<[1], [1], [0], [0], [0, 0, 1, 0], [], []>} : vector<8x8xbf16>, vector<8x8xbf16>, vector<8x8xf32> -> vector<8x8xf32>
    %cst_53 = arith.constant 0.353553385 : f32
    %76 = vector.broadcast %cst_53 : f32 to vector<8x8xf32>
    %77 = arith.mulf %75, %76 : vector<8x8xf32>
    %cst_54 = arith.constant dense<0xFF800000> : vector<8xf32>
    %78 = vector.multi_reduction <maximumf>, %77, %cst_54 [1] : vector<8x8xf32> to vector<8xf32>
    %79 = vector.shape_cast %78 : vector<8xf32> to vector<8x1xf32>
    %80 = vector.broadcast %79 : vector<8x1xf32> to vector<8x8xf32>
    %81 = arith.subf %77, %80 : vector<8x8xf32>
    %82 = math.exp %81 : vector<8x8xf32>
    %cst_55 = arith.constant dense<0.000000e+00> : vector<8xf32>
    %83 = vector.multi_reduction <add>, %82, %cst_55 [1] : vector<8x8xf32> to vector<8xf32>
    %84 = vector.shape_cast %83 : vector<8xf32> to vector<8x1xf32>
    %85 = tpu.reciprocal %84 {approx = true} : vector<8x1xf32> -> vector<8x1xf32>
    %86 = vector.broadcast %85 : vector<8x1xf32> to vector<8x8xf32>
    %87 = arith.mulf %82, %86 : vector<8x8xf32>
    %88 = arith.truncf %87 : vector<8x8xf32> to vector<8x8xbf16>
    %89 = arith.truncf %72 : vector<8x8xf32> to vector<8x8xbf16>
    %cst_56 = arith.constant dense<0.000000e+00> : vector<8x8xf32>
    %90 = tpu.matmul %88, %89, %cst_56 {dimension_numbers = #tpu.dot_dimension_numbers<[1], [0], [0], [1], [0, 0, 1, 1], [], []>} : vector<8x8xbf16>, vector<8x8xbf16>, vector<8x8xf32> -> vector<8x8xf32>
    %91 = arith.truncf %90 : vector<8x8xf32> to vector<8x8xbf16>
    %c0_57 = arith.constant 0 : index
    %c1_58 = arith.constant 1 : index
    %c0_59 = arith.constant 0 : index
    %c0_60 = arith.constant 0 : index
    %92 = vector.load %arg8[%c0_57, %c1_58, %c0_59, %c0_60] : memref<1x4x8x32xbf16, #tpu.memory_space<vmem>>, vector<1x1x8x32xbf16>
    %93 = vector.shape_cast %92 : vector<1x1x8x32xbf16> to vector<8x32xbf16>
    %cst_61 = arith.constant dense<0.000000e+00> : vector<8x32xf32>
    %94 = tpu.matmul %91, %93, %cst_61 {dimension_numbers = #tpu.dot_dimension_numbers<[1], [0], [0], [1], [0, 0, 1, 1], [], []>} : vector<8x8xbf16>, vector<8x32xbf16>, vector<8x32xf32> -> vector<8x32xf32>
    %95 = arith.addf %63, %94 : vector<8x32xf32>
    %c0_62 = arith.constant 0 : index
    %c2 = arith.constant 2 : index
    %c0_63 = arith.constant 0 : index
    %c0_64 = arith.constant 0 : index
    %96 = vector.load %arg5[%c0_62, %c2, %c0_63, %c0_64] : memref<1x4x32x8xbf16, #tpu.memory_space<vmem>>, vector<1x1x32x8xbf16>
    %97 = vector.shape_cast %96 : vector<1x1x32x8xbf16> to vector<32x8xbf16>
    %cst_65 = arith.constant dense<0.000000e+00> : vector<8x8xf32>
    %98 = tpu.matmul %30, %97, %cst_65 {dimension_numbers = #tpu.dot_dimension_numbers<[1], [0], [0], [1], [0, 0, 1, 1], [], []>} : vector<8x32xbf16>, vector<32x8xbf16>, vector<8x8xf32> -> vector<8x8xf32>
    %c0_66 = arith.constant 0 : index
    %c2_67 = arith.constant 2 : index
    %c0_68 = arith.constant 0 : index
    %c0_69 = arith.constant 0 : index
    %99 = vector.load %arg6[%c0_66, %c2_67, %c0_68, %c0_69] : memref<1x4x32x8xbf16, #tpu.memory_space<vmem>>, vector<1x1x32x8xbf16>
    %100 = vector.shape_cast %99 : vector<1x1x32x8xbf16> to vector<32x8xbf16>
    %cst_70 = arith.constant dense<0.000000e+00> : vector<8x8xf32>
    %101 = tpu.matmul %30, %100, %cst_70 {dimension_numbers = #tpu.dot_dimension_numbers<[1], [0], [0], [1], [0, 0, 1, 1], [], []>} : vector<8x32xbf16>, vector<32x8xbf16>, vector<8x8xf32> -> vector<8x8xf32>
    %c0_71 = arith.constant 0 : index
    %c2_72 = arith.constant 2 : index
    %c0_73 = arith.constant 0 : index
    %c0_74 = arith.constant 0 : index
    %102 = vector.load %arg7[%c0_71, %c2_72, %c0_73, %c0_74] : memref<1x4x32x8xbf16, #tpu.memory_space<vmem>>, vector<1x1x32x8xbf16>
    %103 = vector.shape_cast %102 : vector<1x1x32x8xbf16> to vector<32x8xbf16>
    %cst_75 = arith.constant dense<0.000000e+00> : vector<8x8xf32>
    %104 = tpu.matmul %30, %103, %cst_75 {dimension_numbers = #tpu.dot_dimension_numbers<[1], [0], [0], [1], [0, 0, 1, 1], [], []>} : vector<8x32xbf16>, vector<32x8xbf16>, vector<8x8xf32> -> vector<8x8xf32>
    %105 = arith.truncf %98 : vector<8x8xf32> to vector<8x8xbf16>
    %106 = arith.truncf %101 : vector<8x8xf32> to vector<8x8xbf16>
    %cst_76 = arith.constant dense<0.000000e+00> : vector<8x8xf32>
    %107 = tpu.matmul %105, %106, %cst_76 {dimension_numbers = #tpu.dot_dimension_numbers<[1], [1], [0], [0], [0, 0, 1, 0], [], []>} : vector<8x8xbf16>, vector<8x8xbf16>, vector<8x8xf32> -> vector<8x8xf32>
    %cst_77 = arith.constant 0.353553385 : f32
    %108 = vector.broadcast %cst_77 : f32 to vector<8x8xf32>
    %109 = arith.mulf %107, %108 : vector<8x8xf32>
    %cst_78 = arith.constant dense<0xFF800000> : vector<8xf32>
    %110 = vector.multi_reduction <maximumf>, %109, %cst_78 [1] : vector<8x8xf32> to vector<8xf32>
    %111 = vector.shape_cast %110 : vector<8xf32> to vector<8x1xf32>
    %112 = vector.broadcast %111 : vector<8x1xf32> to vector<8x8xf32>
    %113 = arith.subf %109, %112 : vector<8x8xf32>
    %114 = math.exp %113 : vector<8x8xf32>
    %cst_79 = arith.constant dense<0.000000e+00> : vector<8xf32>
    %115 = vector.multi_reduction <add>, %114, %cst_79 [1] : vector<8x8xf32> to vector<8xf32>
    %116 = vector.shape_cast %115 : vector<8xf32> to vector<8x1xf32>
    %117 = tpu.reciprocal %116 {approx = true} : vector<8x1xf32> -> vector<8x1xf32>
    %118 = vector.broadcast %117 : vector<8x1xf32> to vector<8x8xf32>
    %119 = arith.mulf %114, %118 : vector<8x8xf32>
    %120 = arith.truncf %119 : vector<8x8xf32> to vector<8x8xbf16>
    %121 = arith.truncf %104 : vector<8x8xf32> to vector<8x8xbf16>
    %cst_80 = arith.constant dense<0.000000e+00> : vector<8x8xf32>
    %122 = tpu.matmul %120, %121, %cst_80 {dimension_numbers = #tpu.dot_dimension_numbers<[1], [0], [0], [1], [0, 0, 1, 1], [], []>} : vector<8x8xbf16>, vector<8x8xbf16>, vector<8x8xf32> -> vector<8x8xf32>
    %123 = arith.truncf %122 : vector<8x8xf32> to vector<8x8xbf16>
    %c0_81 = arith.constant 0 : index
    %c2_82 = arith.constant 2 : index
    %c0_83 = arith.constant 0 : index
    %c0_84 = arith.constant 0 : index
    %124 = vector.load %arg8[%c0_81, %c2_82, %c0_83, %c0_84] : memref<1x4x8x32xbf16, #tpu.memory_space<vmem>>, vector<1x1x8x32xbf16>
    %125 = vector.shape_cast %124 : vector<1x1x8x32xbf16> to vector<8x32xbf16>
    %cst_85 = arith.constant dense<0.000000e+00> : vector<8x32xf32>
    %126 = tpu.matmul %123, %125, %cst_85 {dimension_numbers = #tpu.dot_dimension_numbers<[1], [0], [0], [1], [0, 0, 1, 1], [], []>} : vector<8x8xbf16>, vector<8x32xbf16>, vector<8x32xf32> -> vector<8x32xf32>
    %127 = arith.addf %95, %126 : vector<8x32xf32>
    %c0_86 = arith.constant 0 : index
    %c3 = arith.constant 3 : index
    %c0_87 = arith.constant 0 : index
    %c0_88 = arith.constant 0 : index
    %128 = vector.load %arg5[%c0_86, %c3, %c0_87, %c0_88] : memref<1x4x32x8xbf16, #tpu.memory_space<vmem>>, vector<1x1x32x8xbf16>
    %129 = vector.shape_cast %128 : vector<1x1x32x8xbf16> to vector<32x8xbf16>
    %cst_89 = arith.constant dense<0.000000e+00> : vector<8x8xf32>
    %130 = tpu.matmul %30, %129, %cst_89 {dimension_numbers = #tpu.dot_dimension_numbers<[1], [0], [0], [1], [0, 0, 1, 1], [], []>} : vector<8x32xbf16>, vector<32x8xbf16>, vector<8x8xf32> -> vector<8x8xf32>
    %c0_90 = arith.constant 0 : index
    %c3_91 = arith.constant 3 : index
    %c0_92 = arith.constant 0 : index
    %c0_93 = arith.constant 0 : index
    %131 = vector.load %arg6[%c0_90, %c3_91, %c0_92, %c0_93] : memref<1x4x32x8xbf16, #tpu.memory_space<vmem>>, vector<1x1x32x8xbf16>
    %132 = vector.shape_cast %131 : vector<1x1x32x8xbf16> to vector<32x8xbf16>
    %cst_94 = arith.constant dense<0.000000e+00> : vector<8x8xf32>
    %133 = tpu.matmul %30, %132, %cst_94 {dimension_numbers = #tpu.dot_dimension_numbers<[1], [0], [0], [1], [0, 0, 1, 1], [], []>} : vector<8x32xbf16>, vector<32x8xbf16>, vector<8x8xf32> -> vector<8x8xf32>
    %c0_95 = arith.constant 0 : index
    %c3_96 = arith.constant 3 : index
    %c0_97 = arith.constant 0 : index
    %c0_98 = arith.constant 0 : index
    %134 = vector.load %arg7[%c0_95, %c3_96, %c0_97, %c0_98] : memref<1x4x32x8xbf16, #tpu.memory_space<vmem>>, vector<1x1x32x8xbf16>
    %135 = vector.shape_cast %134 : vector<1x1x32x8xbf16> to vector<32x8xbf16>
    %cst_99 = arith.constant dense<0.000000e+00> : vector<8x8xf32>
    %136 = tpu.matmul %30, %135, %cst_99 {dimension_numbers = #tpu.dot_dimension_numbers<[1], [0], [0], [1], [0, 0, 1, 1], [], []>} : vector<8x32xbf16>, vector<32x8xbf16>, vector<8x8xf32> -> vector<8x8xf32>
    %137 = arith.truncf %130 : vector<8x8xf32> to vector<8x8xbf16>
    %138 = arith.truncf %133 : vector<8x8xf32> to vector<8x8xbf16>
    %cst_100 = arith.constant dense<0.000000e+00> : vector<8x8xf32>
    %139 = tpu.matmul %137, %138, %cst_100 {dimension_numbers = #tpu.dot_dimension_numbers<[1], [1], [0], [0], [0, 0, 1, 0], [], []>} : vector<8x8xbf16>, vector<8x8xbf16>, vector<8x8xf32> -> vector<8x8xf32>
    %cst_101 = arith.constant 0.353553385 : f32
    %140 = vector.broadcast %cst_101 : f32 to vector<8x8xf32>
    %141 = arith.mulf %139, %140 : vector<8x8xf32>
    %cst_102 = arith.constant dense<0xFF800000> : vector<8xf32>
    %142 = vector.multi_reduction <maximumf>, %141, %cst_102 [1] : vector<8x8xf32> to vector<8xf32>
    %143 = vector.shape_cast %142 : vector<8xf32> to vector<8x1xf32>
    %144 = vector.broadcast %143 : vector<8x1xf32> to vector<8x8xf32>
    %145 = arith.subf %141, %144 : vector<8x8xf32>
    %146 = math.exp %145 : vector<8x8xf32>
    %cst_103 = arith.constant dense<0.000000e+00> : vector<8xf32>
    %147 = vector.multi_reduction <add>, %146, %cst_103 [1] : vector<8x8xf32> to vector<8xf32>
    %148 = vector.shape_cast %147 : vector<8xf32> to vector<8x1xf32>
    %149 = tpu.reciprocal %148 {approx = true} : vector<8x1xf32> -> vector<8x1xf32>
    %150 = vector.broadcast %149 : vector<8x1xf32> to vector<8x8xf32>
    %151 = arith.mulf %146, %150 : vector<8x8xf32>
    %152 = arith.truncf %151 : vector<8x8xf32> to vector<8x8xbf16>
    %153 = arith.truncf %136 : vector<8x8xf32> to vector<8x8xbf16>
    %cst_104 = arith.constant dense<0.000000e+00> : vector<8x8xf32>
    %154 = tpu.matmul %152, %153, %cst_104 {dimension_numbers = #tpu.dot_dimension_numbers<[1], [0], [0], [1], [0, 0, 1, 1], [], []>} : vector<8x8xbf16>, vector<8x8xbf16>, vector<8x8xf32> -> vector<8x8xf32>
    %155 = arith.truncf %154 : vector<8x8xf32> to vector<8x8xbf16>
    %c0_105 = arith.constant 0 : index
    %c3_106 = arith.constant 3 : index
    %c0_107 = arith.constant 0 : index
    %c0_108 = arith.constant 0 : index
    %156 = vector.load %arg8[%c0_105, %c3_106, %c0_107, %c0_108] : memref<1x4x8x32xbf16, #tpu.memory_space<vmem>>, vector<1x1x8x32xbf16>
    %157 = vector.shape_cast %156 : vector<1x1x8x32xbf16> to vector<8x32xbf16>
    %cst_109 = arith.constant dense<0.000000e+00> : vector<8x32xf32>
    %158 = tpu.matmul %155, %157, %cst_109 {dimension_numbers = #tpu.dot_dimension_numbers<[1], [0], [0], [1], [0, 0, 1, 1], [], []>} : vector<8x8xbf16>, vector<8x32xbf16>, vector<8x32xf32> -> vector<8x32xf32>
    %159 = arith.addf %127, %158 : vector<8x32xf32>
    %160 = arith.addf %3, %159 : vector<8x32xf32>
    %c0_110 = arith.constant 0 : index
    %c0_111 = arith.constant 0 : index
    %c0_112 = arith.constant 0 : index
    %161 = vector.load %arg9[%c0_110, %c0_111, %c0_112] : memref<1x1x32xf32, #tpu.memory_space<vmem>>, vector<1x1x32xf32>
    %162 = vector.shape_cast %161 : vector<1x1x32xf32> to vector<1x32xf32>
    %163 = vector.broadcast %162 : vector<1x32xf32> to vector<8x32xf32>
    %164 = arith.addf %160, %163 : vector<8x32xf32>
    %c0_113 = arith.constant 0 : index
    %c0_114 = arith.constant 0 : index
    %c0_115 = arith.constant 0 : index
    %165 = vector.load %arg10[%c0_113, %c0_114, %c0_115] : memref<1x1x32xf32, #tpu.memory_space<vmem>>, vector<1x1x32xf32>
    %166 = vector.shape_cast %165 : vector<1x1x32xf32> to vector<1x32xf32>
    %c0_116 = arith.constant 0 : index
    %c0_117 = arith.constant 0 : index
    %c0_118 = arith.constant 0 : index
    %167 = vector.load %arg11[%c0_116, %c0_117, %c0_118] : memref<1x1x32xf32, #tpu.memory_space<vmem>>, vector<1x1x32xf32>
    %168 = vector.shape_cast %167 : vector<1x1x32xf32> to vector<1x32xf32>
    %cst_119 = arith.constant dense<0.000000e+00> : vector<8xf32>
    %169 = vector.multi_reduction <add>, %164, %cst_119 [1] : vector<8x32xf32> to vector<8xf32>
    %170 = vector.shape_cast %169 : vector<8xf32> to vector<8x1xf32>
    %cst_120 = arith.constant 3.200000e+01 : f32
    %171 = vector.broadcast %cst_120 : f32 to vector<8x1xf32>
    %172 = arith.divf %170, %171 : vector<8x1xf32>
    %173 = vector.broadcast %172 : vector<8x1xf32> to vector<8x32xf32>
    %174 = arith.subf %164, %173 : vector<8x32xf32>
    %175 = arith.mulf %174, %174 : vector<8x32xf32>
    %cst_121 = arith.constant dense<0.000000e+00> : vector<8xf32>
    %176 = vector.multi_reduction <add>, %175, %cst_121 [1] : vector<8x32xf32> to vector<8xf32>
    %177 = vector.shape_cast %176 : vector<8xf32> to vector<8x1xf32>
    %cst_122 = arith.constant 3.200000e+01 : f32
    %178 = vector.broadcast %cst_122 : f32 to vector<8x1xf32>
    %179 = arith.divf %177, %178 : vector<8x1xf32>
    %180 = vector.broadcast %172 : vector<8x1xf32> to vector<8x32xf32>
    %181 = arith.subf %164, %180 : vector<8x32xf32>
    %cst_123 = arith.constant 9.99999974E-6 : f32
    %182 = vector.broadcast %cst_123 : f32 to vector<8x1xf32>
    %183 = arith.addf %179, %182 : vector<8x1xf32>
    %184 = math.rsqrt %183 : vector<8x1xf32>
    %185 = vector.broadcast %184 : vector<8x1xf32> to vector<8x32xf32>
    %186 = arith.mulf %181, %185 : vector<8x32xf32>
    %187 = vector.broadcast %166 : vector<1x32xf32> to vector<8x32xf32>
    %188 = arith.mulf %186, %187 : vector<8x32xf32>
    %189 = vector.broadcast %168 : vector<1x32xf32> to vector<8x32xf32>
    %190 = arith.addf %188, %189 : vector<8x32xf32>
    %191 = arith.truncf %190 : vector<8x32xf32> to vector<8x32xbf16>
    %c0_124 = arith.constant 0 : index
    %c0_125 = arith.constant 0 : index
    %c0_126 = arith.constant 0 : index
    %192 = vector.load %arg12[%c0_124, %c0_125, %c0_126] : memref<1x32x64xbf16, #tpu.memory_space<vmem>>, vector<1x32x64xbf16>
    %193 = vector.shape_cast %192 : vector<1x32x64xbf16> to vector<32x64xbf16>
    %cst_127 = arith.constant dense<0.000000e+00> : vector<8x64xf32>
    %194 = tpu.matmul %191, %193, %cst_127 {dimension_numbers = #tpu.dot_dimension_numbers<[1], [0], [0], [1], [0, 0, 1, 1], [], []>} : vector<8x32xbf16>, vector<32x64xbf16>, vector<8x64xf32> -> vector<8x64xf32>
    %c0_128 = arith.constant 0 : index
    %c0_129 = arith.constant 0 : index
    %c0_130 = arith.constant 0 : index
    %195 = vector.load %arg13[%c0_128, %c0_129, %c0_130] : memref<1x1x64xf32, #tpu.memory_space<vmem>>, vector<1x1x64xf32>
    %196 = vector.shape_cast %195 : vector<1x1x64xf32> to vector<1x64xf32>
    %197 = vector.broadcast %196 : vector<1x64xf32> to vector<8x64xf32>
    %198 = arith.addf %194, %197 : vector<8x64xf32>
    %cst_131 = arith.constant 5.000000e-01 : f32
    %199 = vector.broadcast %cst_131 : f32 to vector<8x64xf32>
    %200 = arith.mulf %199, %198 : vector<8x64xf32>
    %cst_132 = arith.constant 2.000000e+00 : f32
    %201 = math.sqrt %cst_132 : f32
    %cst_133 = arith.constant 1.000000e+00 : f32
    %202 = arith.divf %cst_133, %201 : f32
    %203 = vector.broadcast %202 : f32 to vector<8x64xf32>
    %204 = arith.mulf %198, %203 : vector<8x64xf32>
    %205 = math.erf %204 : vector<8x64xf32>
    %cst_134 = arith.constant 1.000000e+00 : f32
    %206 = vector.broadcast %cst_134 : f32 to vector<8x64xf32>
    %207 = arith.addf %206, %205 : vector<8x64xf32>
    %208 = arith.mulf %200, %207 : vector<8x64xf32>
    %209 = arith.truncf %208 : vector<8x64xf32> to vector<8x64xbf16>
    %c0_135 = arith.constant 0 : index
    %c0_136 = arith.constant 0 : index
    %c0_137 = arith.constant 0 : index
    %210 = vector.load %arg14[%c0_135, %c0_136, %c0_137] : memref<1x64x32xbf16, #tpu.memory_space<vmem>>, vector<1x64x32xbf16>
    %211 = vector.shape_cast %210 : vector<1x64x32xbf16> to vector<64x32xbf16>
    %cst_138 = arith.constant dense<0.000000e+00> : vector<8x32xf32>
    %212 = tpu.matmul %209, %211, %cst_138 {dimension_numbers = #tpu.dot_dimension_numbers<[1], [0], [0], [1], [0, 0, 1, 1], [], []>} : vector<8x64xbf16>, vector<64x32xbf16>, vector<8x32xf32> -> vector<8x32xf32>
    %213 = arith.addf %164, %212 : vector<8x32xf32>
    %c0_139 = arith.constant 0 : index
    %c0_140 = arith.constant 0 : index
    %c0_141 = arith.constant 0 : index
    %214 = vector.load %arg15[%c0_139, %c0_140, %c0_141] : memref<1x1x32xf32, #tpu.memory_space<vmem>>, vector<1x1x32xf32>
    %215 = vector.shape_cast %214 : vector<1x1x32xf32> to vector<1x32xf32>
    %216 = vector.broadcast %215 : vector<1x32xf32> to vector<8x32xf32>
    %217 = arith.addf %213, %216 : vector<8x32xf32>
    %c0_142 = arith.constant 0 : index
    %c0_143 = arith.constant 0 : index
    %218 = vector.load %arg17[%c0_142, %c0_143] : memref<8x32xf32, #tpu.memory_space<vmem>>, vector<8x32xf32>
    tpu.vector_store %arg17[%c0_142, %c0_143], %217 {strides = array<i32>} : memref<8x32xf32, #tpu.memory_space<vmem>>, vector<8x32xf32>,
    %c1_i32 = arith.constant 1 : i32
    %219 = arith.cmpi eq, %arg1, %c1_i32 : i32
    %220 = arith.extui %219 : i1 to i32
    %c0_i32_144 = arith.constant 0 : i32
    %221 = arith.cmpi ne, %220, %c0_i32_144 : i32
    scf.if %221 {
      %c0_145 = arith.constant 0 : index
      %c0_146 = arith.constant 0 : index
      %c0_147 = arith.constant 0 : index
      %222 = vector.load %arg16[%c0_145, %c0_146, %c0_147] : memref<1x8x32xf32, #tpu.memory_space<vmem>>, vector<1x8x32xf32>
      %223 = vector.shape_cast %222 : vector<1x8x32xf32> to vector<8x32xf32>
      %224 = vector.shape_cast %217 : vector<8x32xf32> to vector<1x8x32xf32>
      tpu.vector_store %arg16[%c0_145, %c0_146, %c0_147], %224 {strides = array<i32>} : memref<1x8x32xf32, #tpu.memory_space<vmem>>, vector<1x8x32xf32>,
    } else {
    }
    return
  }
  func.func @transform_0(%arg0: i32, %arg1: i32) -> (i32, i32, i32) {
    %c0_i32 = arith.constant 0 : i32
    %c0_i32_0 = arith.constant 0 : i32
    %c0_i32_1 = arith.constant 0 : i32
    return %arg0, %c0_i32, %c0_i32_0 : i32, i32, i32
  }
  func.func @transform_1(%arg0: i32, %arg1: i32) -> (i32, i32, i32) {
    %c0_i32 = arith.constant 0 : i32
    %c0_i32_0 = arith.constant 0 : i32
    %c0_i32_1 = arith.constant 0 : i32
    return %arg1, %c0_i32, %c0_i32_0 : i32, i32, i32
  }
  func.func @transform_2(%arg0: i32, %arg1: i32) -> (i32, i32, i32) {
    %c0_i32 = arith.constant 0 : i32
    %c0_i32_0 = arith.constant 0 : i32
    %c0_i32_1 = arith.constant 0 : i32
    return %arg1, %c0_i32, %c0_i32_0 : i32, i32, i32
  }
  func.func @transform_3(%arg0: i32, %arg1: i32) -> (i32, i32, i32, i32) {
    %c0_i32 = arith.constant 0 : i32
    %c0_i32_0 = arith.constant 0 : i32
    %c0_i32_1 = arith.constant 0 : i32
    %c0_i32_2 = arith.constant 0 : i32
    return %arg1, %c0_i32, %c0_i32_0, %c0_i32_1 : i32, i32, i32, i32
  }
  func.func @transform_4(%arg0: i32, %arg1: i32) -> (i32, i32, i32, i32) {
    %c0_i32 = arith.constant 0 : i32
    %c0_i32_0 = arith.constant 0 : i32
    %c0_i32_1 = arith.constant 0 : i32
    %c0_i32_2 = arith.constant 0 : i32
    return %arg1, %c0_i32, %c0_i32_0, %c0_i32_1 : i32, i32, i32, i32
  }
  func.func @transform_5(%arg0: i32, %arg1: i32) -> (i32, i32, i32, i32) {
    %c0_i32 = arith.constant 0 : i32
    %c0_i32_0 = arith.constant 0 : i32
    %c0_i32_1 = arith.constant 0 : i32
    %c0_i32_2 = arith.constant 0 : i32
    return %arg1, %c0_i32, %c0_i32_0, %c0_i32_1 : i32, i32, i32, i32
  }
  func.func @transform_6(%arg0: i32, %arg1: i32) -> (i32, i32, i32, i32) {
    %c0_i32 = arith.constant 0 : i32
    %c0_i32_0 = arith.constant 0 : i32
    %c0_i32_1 = arith.constant 0 : i32
    %c0_i32_2 = arith.constant 0 : i32
    return %arg1, %c0_i32, %c0_i32_0, %c0_i32_1 : i32, i32, i32, i32
  }
  func.func @transform_7(%arg0: i32, %arg1: i32) -> (i32, i32, i32) {
    %c0_i32 = arith.constant 0 : i32
    %c0_i32_0 = arith.constant 0 : i32
    %c0_i32_1 = arith.constant 0 : i32
    return %arg1, %c0_i32, %c0_i32_0 : i32, i32, i32
  }
  func.func @transform_8(%arg0: i32, %arg1: i32) -> (i32, i32, i32) {
    %c0_i32 = arith.constant 0 : i32
    %c0_i32_0 = arith.constant 0 : i32
    %c0_i32_1 = arith.constant 0 : i32
    return %arg1, %c0_i32, %c0_i32_0 : i32, i32, i32
  }
  func.func @transform_9(%arg0: i32, %arg1: i32) -> (i32, i32, i32) {
    %c0_i32 = arith.constant 0 : i32
    %c0_i32_0 = arith.constant 0 : i32
    %c0_i32_1 = arith.constant 0 : i32
    return %arg1, %c0_i32, %c0_i32_0 : i32, i32, i32
  }
  func.func @transform_10(%arg0: i32, %arg1: i32) -> (i32, i32, i32) {
    %c0_i32 = arith.constant 0 : i32
    %c0_i32_0 = arith.constant 0 : i32
    %c0_i32_1 = arith.constant 0 : i32
    return %arg1, %c0_i32, %c0_i32_0 : i32, i32, i32
  }
  func.func @transform_11(%arg0: i32, %arg1: i32) -> (i32, i32, i32) {
    %c0_i32 = arith.constant 0 : i32
    %c0_i32_0 = arith.constant 0 : i32
    %c0_i32_1 = arith.constant 0 : i32
    return %arg1, %c0_i32, %c0_i32_0 : i32, i32, i32
  }
  func.func @transform_12(%arg0: i32, %arg1: i32) -> (i32, i32, i32) {
    %c0_i32 = arith.constant 0 : i32
    %c0_i32_0 = arith.constant 0 : i32
    %c0_i32_1 = arith.constant 0 : i32
    return %arg1, %c0_i32, %c0_i32_0 : i32, i32, i32
  }
  func.func @transform_13(%arg0: i32, %arg1: i32) -> (i32, i32, i32) {
    %c0_i32 = arith.constant 0 : i32
    %c0_i32_0 = arith.constant 0 : i32
    %c0_i32_1 = arith.constant 0 : i32
    return %arg1, %c0_i32, %c0_i32_0 : i32, i32, i32
  }
  func.func @transform_14(%arg0: i32, %arg1: i32) -> (i32, i32, i32) {
    %c0_i32 = arith.constant 0 : i32
    %c0_i32_0 = arith.constant 0 : i32
    %c0_i32_1 = arith.constant 0 : i32
    return %arg0, %c0_i32, %c0_i32_0 : i32, i32, i32
  }
}

</mosaic_0001>

<llo_original>
// kernel: tpu_custom_call.1
$region0: #{tpu_custom_call.1}
  #allocation0 [shape = 'u32[]', space=smem, size = 0x4, offset = 0x4, fixed_abs, tag = 'smem constant byte address 0x4 - core index']
  #allocation1 [shape = 'u32[144,128]{1,0:T(1,128)}', space=vmem, size = 0x12000, scoped, tag = 'internal scratch']
  #allocation2 [shape = 'f32[8,32]{1,0:T(8,128)}', space=vmem, size = 0x1000, scoped, tag = 'scratch operand']
  %s0 = inlined_call_operand.vmem [shape: f32[2,8,32], index: 0, kind: input, shape index: {}]
  %s1 = inlined_call_operand.vmem [shape: f32[2,1,32], index: 1, kind: input, shape index: {}]
  %s2 = inlined_call_operand.vmem [shape: f32[2,1,32], index: 2, kind: input, shape index: {}]
  %s3 = inlined_call_operand.vmem [shape: bf16[2,4,32,8], index: 3, kind: input, shape index: {}]
  %s4 = inlined_call_operand.vmem [shape: bf16[2,4,32,8], index: 4, kind: input, shape index: {}]
  %s5 = inlined_call_operand.vmem [shape: bf16[2,4,32,8], index: 5, kind: input, shape index: {}]
  %s6 = inlined_call_operand.vmem [shape: bf16[2,4,8,32], index: 6, kind: input, shape index: {}]
  %s7 = inlined_call_operand.vmem [shape: f32[2,1,32], index: 7, kind: input, shape index: {}]
  %s8 = inlined_call_operand.vmem [shape: f32[2,1,32], index: 8, kind: input, shape index: {}]
  %s9 = inlined_call_operand.vmem [shape: f32[2,1,32], index: 9, kind: input, shape index: {}]
  %s10 = inlined_call_operand.vmem [shape: bf16[2,32,64], index: 10, kind: input, shape index: {}]
  %s11 = inlined_call_operand.vmem [shape: f32[2,1,64], index: 11, kind: input, shape index: {}]
  %s12 = inlined_call_operand.vmem [shape: bf16[2,64,32], index: 12, kind: input, shape index: {}]
  %s13 = inlined_call_operand.vmem [shape: f32[2,1,32], index: 13, kind: input, shape index: {}]
  %s14 = inlined_call_operand.hbm [shape: f32[2,8,32], index: 14, kind: output, shape index: {}]
  %s15 = sld [smem:[#allocation0]]
  $region97: #{tpu_custom_call.1} parent=0
    _
  %s17 = ssub.s32 1, %s15
  %s18 = scalar_select 0, %s17, %s15
  $region1: #{tpu_custom_call.1} parent=0
    #allocation3 [shape = 'u8[8192]{0}', space=vmem, size = 0x2000, scoped, tag = 'output window, operand 0']
    #allocation4 [shape = 's32[2]{0}', space=sflag, size = 0x8, scoped, tag = 'scoped memory for tpu_custom_call.1']
    %19 = vsyncpa [#allocation4], 0
    %s20 = scalar_lea.sflag [#allocation4], 1
    %21 = vsyncpa %s20, 0
    loop: start=0, step=1, limit=6
    $region2: #{tpu_custom_call.1} parent=1 // loop_pre_header
      _
    $region3: #{tpu_custom_call.1} parent=1 // loop_header
      %s23 = sphi 0, %s27
      %p24 = scmp.ge.s32.totalorder %s23, 6
      %s30 = sphi 0, %s42
      %s31 = sphi 0, %s38
      %s32 = sphi 0, %s30
      %s33 = sphi 0, %s31
      %s34 = sphi 0, %s32
      %s35 = sphi 0, %s33
      %s45 = sphi 0, %s47
      %s48 = sphi 0, %s45
      %s49 = sphi 0, %s48
      %s65 = sphi 0, %s49
      %s71 = sphi 0, %s73
      %s74 = sphi 0, %s71
      %s75 = sphi 0, %s74
      %s91 = sphi 0, %s75
      %s97 = sphi 0, %s99
      %s100 = sphi 0, %s97
      %s101 = sphi 0, %s100
      %s117 = sphi 0, %s101
      %s123 = sphi 0, %s125
      %s126 = sphi 0, %s123
      %s127 = sphi 0, %s126
      %s143 = sphi 0, %s127
      %s149 = sphi 0, %s151
      %s152 = sphi 0, %s149
      %s153 = sphi 0, %s152
      %s169 = sphi 0, %s153
      %s175 = sphi 0, %s177
      %s178 = sphi 0, %s175
      %s179 = sphi 0, %s178
      %s195 = sphi 0, %s179
      %s201 = sphi 0, %s203
      %s204 = sphi 0, %s201
      %s205 = sphi 0, %s204
      %s221 = sphi 0, %s205
      %s227 = sphi 0, %s229
      %s230 = sphi 0, %s227
      %s231 = sphi 0, %s230
      %s247 = sphi 0, %s231
      %s253 = sphi 0, %s255
      %s256 = sphi 0, %s253
      %s257 = sphi 0, %s256
      %s273 = sphi 0, %s257
      %s279 = sphi 0, %s281
      %s282 = sphi 0, %s279
      %s283 = sphi 0, %s282
      %s299 = sphi 0, %s283
      %s305 = sphi 0, %s307
      %s308 = sphi 0, %s305
      %s309 = sphi 0, %s308
      %s325 = sphi 0, %s309
      %s331 = sphi 0, %s333
      %s334 = sphi 0, %s331
      %s335 = sphi 0, %s334
      %s351 = sphi 0, %s335
      %s357 = sphi 0, %s359
      %s360 = sphi 0, %s357
      %s361 = sphi 0, %s360
      %s377 = sphi 0, %s361
      %s383 = sphi 0, %s385
      %s386 = sphi 0, %s383
      %s387 = sphi 0, %s386
      %s403 = sphi 0, %s387
      %s409 = sphi 0, %s411
      %s412 = sphi 0, %s409
      %s413 = sphi 0, %s412
      %s429 = sphi 0, %s413
    $region4: #{tpu_custom_call.1} parent=1 // loop_header_branch
      %26 = sbr.rel (%p24) target = $region8
    $region5: #{tpu_custom_call.1} parent=1 // loop_body
      %s28 = ssub.s32 %s23, 1
      %s29 = ssub.s32 %s23, 2
      %s36 = sadd.s32 1, %s31
      %p37 = scmp.ge.s32.totalorder %s36, 2
      %s38 = scalar_select %p37, 0, %s36
      %s39 = sadd.s32 1, %s30
      %s40 = scalar_select %p37, %s39, %s30
      %p41 = scmp.ge.s32.totalorder %s40, 2
      %s42 = scalar_select %p41, 0, %s40
      %s43 = ssub.s32 %s30, %s42
      %p44 = scmp.eq.s32.totalorder %s43, 0
      %s46 = sadd.s32 %s45, 1
      %s47 = scalar_select %p44, %s45, %s46
      %p50 = pneg %p44
      %p51 = scmp.eq.s32.totalorder %s23, 3
      %p52 = por %p50, %p51
      %p53 = scmp.ne.s32.totalorder %s45, %s48
      %p54 = scmp.eq.s32.totalorder %s23, 0
      %p55 = por %p53, %p54
      %p56 = scmp.ne.s32.totalorder %s45, %s48
      %p57 = scmp.eq.s32.totalorder %s28, 3
      %p58 = por %p56, %p57
      %p59 = scmp.ne.s32.totalorder %s48, %s49
      %p60 = scmp.eq.s32.totalorder %s28, 0
      %p61 = por %p59, %p60
      %p62 = scmp.ne.s32.totalorder %s48, %s49
      %p63 = scmp.eq.s32.totalorder %s29, 3
      %p64 = por %p62, %p63
      %p66 = scmp.ne.s32.totalorder %s49, %s65
      %p67 = scmp.eq.s32.totalorder %s29, 0
      %p68 = por %p66, %p67
      %s69 = ssub.s32 %s31, %s38
      %p70 = scmp.eq.s32.totalorder %s69, 0
      %s72 = sadd.s32 %s71, 1
      %s73 = scalar_select %p70, %s71, %s72
      %p76 = pneg %p70
      %p77 = scmp.eq.s32.totalorder %s23, 3
      %p78 = por %p76, %p77
      %p79 = scmp.ne.s32.totalorder %s71, %s74
      %p80 = scmp.eq.s32.totalorder %s23, 0
      %p81 = por %p79, %p80
      %p82 = scmp.ne.s32.totalorder %s71, %s74
      %p83 = scmp.eq.s32.totalorder %s28, 3
      %p84 = por %p82, %p83
      %p85 = scmp.ne.s32.totalorder %s74, %s75
      %p86 = scmp.eq.s32.totalorder %s28, 0
      %p87 = por %p85, %p86
      %p88 = scmp.ne.s32.totalorder %s74, %s75
      %p89 = scmp.eq.s32.totalorder %s29, 3
      %p90 = por %p88, %p89
      %p92 = scmp.ne.s32.totalorder %s75, %s91
      %p93 = scmp.eq.s32.totalorder %s29, 0
      %p94 = por %p92, %p93
      %s95 = ssub.s32 %s31, %s38
      %p96 = scmp.eq.s32.totalorder %s95, 0
      %s98 = sadd.s32 %s97, 1
      %s99 = scalar_select %p96, %s97, %s98
      %p102 = pneg %p96
      %p103 = scmp.eq.s32.totalorder %s23, 3
      %p104 = por %p102, %p103
      %p105 = scmp.ne.s32.totalorder %s97, %s100
      %p106 = scmp.eq.s32.totalorder %s23, 0
      %p107 = por %p105, %p106
      %p108 = scmp.ne.s32.totalorder %s97, %s100
      %p109 = scmp.eq.s32.totalorder %s28, 3
      %p110 = por %p108, %p109
      %p111 = scmp.ne.s32.totalorder %s100, %s101
      %p112 = scmp.eq.s32.totalorder %s28, 0
      %p113 = por %p111, %p112
      %p114 = scmp.ne.s32.totalorder %s100, %s101
      %p115 = scmp.eq.s32.totalorder %s29, 3
      %p116 = por %p114, %p115
      %p118 = scmp.ne.s32.totalorder %s101, %s117
      %p119 = scmp.eq.s32.totalorder %s29, 0
      %p120 = por %p118, %p119
      %s121 = ssub.s32 %s31, %s38
      %p122 = scmp.eq.s32.totalorder %s121, 0
      %s124 = sadd.s32 %s123, 1
      %s125 = scalar_select %p122, %s123, %s124
      %p128 = pneg %p122
      %p129 = scmp.eq.s32.totalorder %s23, 3
      %p130 = por %p128, %p129
      %p131 = scmp.ne.s32.totalorder %s123, %s126
      %p132 = scmp.eq.s32.totalorder %s23, 0
      %p133 = por %p131, %p132
      %p134 = scmp.ne.s32.totalorder %s123, %s126
      %p135 = scmp.eq.s32.totalorder %s28, 3
      %p136 = por %p134, %p135
      %p137 = scmp.ne.s32.totalorder %s126, %s127
      %p138 = scmp.eq.s32.totalorder %s28, 0
      %p139 = por %p137, %p138
      %p140 = scmp.ne.s32.totalorder %s126, %s127
      %p141 = scmp.eq.s32.totalorder %s29, 3
      %p142 = por %p140, %p141
      %p144 = scmp.ne.s32.totalorder %s127, %s143
      %p145 = scmp.eq.s32.totalorder %s29, 0
      %p146 = por %p144, %p145
      %s147 = ssub.s32 %s31, %s38
      %p148 = scmp.eq.s32.totalorder %s147, 0
      %s150 = sadd.s32 %s149, 1
      %s151 = scalar_select %p148, %s149, %s150
      %p154 = pneg %p148
      %p155 = scmp.eq.s32.totalorder %s23, 3
      %p156 = por %p154, %p155
      %p157 = scmp.ne.s32.totalorder %s149, %s152
      %p158 = scmp.eq.s32.totalorder %s23, 0
      %p159 = por %p157, %p158
      %p160 = scmp.ne.s32.totalorder %s149, %s152
      %p161 = scmp.eq.s32.totalorder %s28, 3
      %p162 = por %p160, %p161
      %p163 = scmp.ne.s32.totalorder %s152, %s153
      %p164 = scmp.eq.s32.totalorder %s28, 0
      %p165 = por %p163, %p164
      %p166 = scmp.ne.s32.totalorder %s152, %s153
      %p167 = scmp.eq.s32.totalorder %s29, 3
      %p168 = por %p166, %p167
      %p170 = scmp.ne.s32.totalorder %s153, %s169
      %p171 = scmp.eq.s32.totalorder %s29, 0
      %p172 = por %p170, %p171
      %s173 = ssub.s32 %s31, %s38
      %p174 = scmp.eq.s32.totalorder %s173, 0
      %s176 = sadd.s32 %s175, 1
      %s177 = scalar_select %p174, %s175, %s176
      %p180 = pneg %p174
      %p181 = scmp.eq.s32.totalorder %s23, 3
      %p182 = por %p180, %p181
      %p183 = scmp.ne.s32.totalorder %s175, %s178
      %p184 = scmp.eq.s32.totalorder %s23, 0
      %p185 = por %p183, %p184
      %p186 = scmp.ne.s32.totalorder %s175, %s178
      %p187 = scmp.eq.s32.totalorder %s28, 3
      %p188 = por %p186, %p187
      %p189 = scmp.ne.s32.totalorder %s178, %s179
      %p190 = scmp.eq.s32.totalorder %s28, 0
      %p191 = por %p189, %p190
      %p192 = scmp.ne.s32.totalorder %s178, %s179
      %p193 = scmp.eq.s32.totalorder %s29, 3
      %p194 = por %p192, %p193
      %p196 = scmp.ne.s32.totalorder %s179, %s195
      %p197 = scmp.eq.s32.totalorder %s29, 0
      %p198 = por %p196, %p197
      %s199 = ssub.s32 %s31, %s38
      %p200 = scmp.eq.s32.totalorder %s199, 0
      %s202 = sadd.s32 %s201, 1
      %s203 = scalar_select %p200, %s201, %s202
      %p206 = pneg %p200
      %p207 = scmp.eq.s32.totalorder %s23, 3
      %p208 = por %p206, %p207
      %p209 = scmp.ne.s32.totalorder %s201, %s204
      %p210 = scmp.eq.s32.totalorder %s23, 0
      %p211 = por %p209, %p210
      %p212 = scmp.ne.s32.totalorder %s201, %s204
      %p213 = scmp.eq.s32.totalorder %s28, 3
      %p214 = por %p212, %p213
      %p215 = scmp.ne.s32.totalorder %s204, %s205
      %p216 = scmp.eq.s32.totalorder %s28, 0
      %p217 = por %p215, %p216
      %p218 = scmp.ne.s32.totalorder %s204, %s205
      %p219 = scmp.eq.s32.totalorder %s29, 3
      %p220 = por %p218, %p219
      %p222 = scmp.ne.s32.totalorder %s205, %s221
      %p223 = scmp.eq.s32.totalorder %s29, 0
      %p224 = por %p222, %p223
      %s225 = ssub.s32 %s31, %s38
      %p226 = scmp.eq.s32.totalorder %s225, 0
      %s228 = sadd.s32 %s227, 1
      %s229 = scalar_select %p226, %s227, %s228
      %p232 = pneg %p226
      %p233 = scmp.eq.s32.totalorder %s23, 3
      %p234 = por %p232, %p233
      %p235 = scmp.ne.s32.totalorder %s227, %s230
      %p236 = scmp.eq.s32.totalorder %s23, 0
      %p237 = por %p235, %p236
      %p238 = scmp.ne.s32.totalorder %s227, %s230
      %p239 = scmp.eq.s32.totalorder %s28, 3
      %p240 = por %p238, %p239
      %p241 = scmp.ne.s32.totalorder %s230, %s231
      %p242 = scmp.eq.s32.totalorder %s28, 0
      %p243 = por %p241, %p242
      %p244 = scmp.ne.s32.totalorder %s230, %s231
      %p245 = scmp.eq.s32.totalorder %s29, 3
      %p246 = por %p244, %p245
      %p248 = scmp.ne.s32.totalorder %s231, %s247
      %p249 = scmp.eq.s32.totalorder %s29, 0
      %p250 = por %p248, %p249
      %s251 = ssub.s32 %s31, %s38
      %p252 = scmp.eq.s32.totalorder %s251, 0
      %s254 = sadd.s32 %s253, 1
      %s255 = scalar_select %p252, %s253, %s254
      %p258 = pneg %p252
      %p259 = scmp.eq.s32.totalorder %s23, 3
      %p260 = por %p258, %p259
      %p261 = scmp.ne.s32.totalorder %s253, %s256
      %p262 = scmp.eq.s32.totalorder %s23, 0
      %p263 = por %p261, %p262
      %p264 = scmp.ne.s32.totalorder %s253, %s256
      %p265 = scmp.eq.s32.totalorder %s28, 3
      %p266 = por %p264, %p265
      %p267 = scmp.ne.s32.totalorder %s256, %s257
      %p268 = scmp.eq.s32.totalorder %s28, 0
      %p269 = por %p267, %p268
      %p270 = scmp.ne.s32.totalorder %s256, %s257
      %p271 = scmp.eq.s32.totalorder %s29, 3
      %p272 = por %p270, %p271
      %p274 = scmp.ne.s32.totalorder %s257, %s273
      %p275 = scmp.eq.s32.totalorder %s29, 0
      %p276 = por %p274, %p275
      %s277 = ssub.s32 %s31, %s38
      %p278 = scmp.eq.s32.totalorder %s277, 0
      %s280 = sadd.s32 %s279, 1
      %s281 = scalar_select %p278, %s279, %s280
      %p284 = pneg %p278
      %p285 = scmp.eq.s32.totalorder %s23, 3
      %p286 = por %p284, %p285
      %p287 = scmp.ne.s32.totalorder %s279, %s282
      %p288 = scmp.eq.s32.totalorder %s23, 0
      %p289 = por %p287, %p288
      %p290 = scmp.ne.s32.totalorder %s279, %s282
      %p291 = scmp.eq.s32.totalorder %s28, 3
      %p292 = por %p290, %p291
      %p293 = scmp.ne.s32.totalorder %s282, %s283
      %p294 = scmp.eq.s32.totalorder %s28, 0
      %p295 = por %p293, %p294
      %p296 = scmp.ne.s32.totalorder %s282, %s283
      %p297 = scmp.eq.s32.totalorder %s29, 3
      %p298 = por %p296, %p297
      %p300 = scmp.ne.s32.totalorder %s283, %s299
      %p301 = scmp.eq.s32.totalorder %s29, 0
      %p302 = por %p300, %p301
      %s303 = ssub.s32 %s31, %s38
      %p304 = scmp.eq.s32.totalorder %s303, 0
      %s306 = sadd.s32 %s305, 1
      %s307 = scalar_select %p304, %s305, %s306
      %p310 = pneg %p304
      %p311 = scmp.eq.s32.totalorder %s23, 3
      %p312 = por %p310, %p311
      %p313 = scmp.ne.s32.totalorder %s305, %s308
      %p314 = scmp.eq.s32.totalorder %s23, 0
      %p315 = por %p313, %p314
      %p316 = scmp.ne.s32.totalorder %s305, %s308
      %p317 = scmp.eq.s32.totalorder %s28, 3
      %p318 = por %p316, %p317
      %p319 = scmp.ne.s32.totalorder %s308, %s309
      %p320 = scmp.eq.s32.totalorder %s28, 0
      %p321 = por %p319, %p320
      %p322 = scmp.ne.s32.totalorder %s308, %s309
      %p323 = scmp.eq.s32.totalorder %s29, 3
      %p324 = por %p322, %p323
      %p326 = scmp.ne.s32.totalorder %s309, %s325
      %p327 = scmp.eq.s32.totalorder %s29, 0
      %p328 = por %p326, %p327
      %s329 = ssub.s32 %s31, %s38
      %p330 = scmp.eq.s32.totalorder %s329, 0
      %s332 = sadd.s32 %s331, 1
      %s333 = scalar_select %p330, %s331, %s332
      %p336 = pneg %p330
      %p337 = scmp.eq.s32.totalorder %s23, 3
      %p338 = por %p336, %p337
      %p339 = scmp.ne.s32.totalorder %s331, %s334
      %p340 = scmp.eq.s32.totalorder %s23, 0
      %p341 = por %p339, %p340
      %p342 = scmp.ne.s32.totalorder %s331, %s334
      %p343 = scmp.eq.s32.totalorder %s28, 3
      %p344 = por %p342, %p343
      %p345 = scmp.ne.s32.totalorder %s334, %s335
      %p346 = scmp.eq.s32.totalorder %s28, 0
      %p347 = por %p345, %p346
      %p348 = scmp.ne.s32.totalorder %s334, %s335
      %p349 = scmp.eq.s32.totalorder %s29, 3
      %p350 = por %p348, %p349
      %p352 = scmp.ne.s32.totalorder %s335, %s351
      %p353 = scmp.eq.s32.totalorder %s29, 0
      %p354 = por %p352, %p353
      %s355 = ssub.s32 %s31, %s38
      %p356 = scmp.eq.s32.totalorder %s355, 0
      %s358 = sadd.s32 %s357, 1
      %s359 = scalar_select %p356, %s357, %s358
      %p362 = pneg %p356
      %p363 = scmp.eq.s32.totalorder %s23, 3
      %p364 = por %p362, %p363
      %p365 = scmp.ne.s32.totalorder %s357, %s360
      %p366 = scmp.eq.s32.totalorder %s23, 0
      %p367 = por %p365, %p366
      %p368 = scmp.ne.s32.totalorder %s357, %s360
      %p369 = scmp.eq.s32.totalorder %s28, 3
      %p370 = por %p368, %p369
      %p371 = scmp.ne.s32.totalorder %s360, %s361
      %p372 = scmp.eq.s32.totalorder %s28, 0
      %p373 = por %p371, %p372
      %p374 = scmp.ne.s32.totalorder %s360, %s361
      %p375 = scmp.eq.s32.totalorder %s29, 3
      %p376 = por %p374, %p375
      %p378 = scmp.ne.s32.totalorder %s361, %s377
      %p379 = scmp.eq.s32.totalorder %s29, 0
      %p380 = por %p378, %p379
      %s381 = ssub.s32 %s31, %s38
      %p382 = scmp.eq.s32.totalorder %s381, 0
      %s384 = sadd.s32 %s383, 1
      %s385 = scalar_select %p382, %s383, %s384
      %p388 = pneg %p382
      %p389 = scmp.eq.s32.totalorder %s23, 3
      %p390 = por %p388, %p389
      %p391 = scmp.ne.s32.totalorder %s383, %s386
      %p392 = scmp.eq.s32.totalorder %s23, 0
      %p393 = por %p391, %p392
      %p394 = scmp.ne.s32.totalorder %s383, %s386
      %p395 = scmp.eq.s32.totalorder %s28, 3
      %p396 = por %p394, %p395
      %p397 = scmp.ne.s32.totalorder %s386, %s387
      %p398 = scmp.eq.s32.totalorder %s28, 0
      %p399 = por %p397, %p398
      %p400 = scmp.ne.s32.totalorder %s386, %s387
      %p401 = scmp.eq.s32.totalorder %s29, 3
      %p402 = por %p400, %p401
      %p404 = scmp.ne.s32.totalorder %s387, %s403
      %p405 = scmp.eq.s32.totalorder %s29, 0
      %p406 = por %p404, %p405
      %s407 = ssub.s32 %s30, %s42
      %p408 = scmp.eq.s32.totalorder %s407, 0
      %s410 = sadd.s32 %s409, 1
      %s411 = scalar_select %p408, %s409, %s410
      %p414 = pneg %p408
      %p415 = scmp.eq.s32.totalorder %s23, 3
      %p416 = por %p414, %p415
      %p417 = scmp.ne.s32.totalorder %s409, %s412
      %p418 = scmp.eq.s32.totalorder %s23, 0
      %p419 = por %p417, %p418
      %p420 = scmp.ne.s32.totalorder %s409, %s412
      %p421 = scmp.eq.s32.totalorder %s28, 3
      %p422 = por %p420, %p421
      %p423 = scmp.ne.s32.totalorder %s412, %s413
      %p424 = scmp.eq.s32.totalorder %s28, 0
      %p425 = por %p423, %p424
      %p426 = scmp.ne.s32.totalorder %s412, %s413
      %p427 = scmp.eq.s32.totalorder %s29, 3
      %p428 = por %p426, %p427
      %p430 = scmp.ne.s32.totalorder %s413, %s429
      %p431 = scmp.eq.s32.totalorder %s29, 0
      %p432 = por %p430, %p431
      %p433 = scmp.le.s32.totalorder 1, %s23
      %p434 = scmp.lt.s32.totalorder %s23, 5
      %p435 = pnand %p433, %p434
      %p436 = pneg %p435
      // Predicated region
      $region9: #{tpu_custom_call.1} parent=5 // pred_check
        _
      $region10: #{tpu_custom_call.1} parent=5 // pred_check_branch
        %438 = sbr.rel (%p435) target = $region12
      $region11: #{tpu_custom_call.1} parent=5 // pred_region
        %s439 = ssub.s32 %s23, 1
      $region12: #{tpu_custom_call.1} parent=5 // pred_fallthru
        _
      %p440 = scmp.lt.s32.totalorder %s23, 4
      // Predicated region
      $region13: #{tpu_custom_call.1} parent=5 // pred_check
        %p441 = pneg %p440
      $region14: #{tpu_custom_call.1} parent=5 // pred_check_branch
        %443 = sbr.rel (%p441) target = $region16
      $region15: #{tpu_custom_call.1} parent=5 // pred_region
        // Predicated region
        $region17: #{tpu_custom_call.1} parent=15 // pred_check
          %p444 = pneg %p55
        $region18: #{tpu_custom_call.1} parent=15 // pred_check_branch
          %446 = sbr.rel (%p444) target = $region20
        $region19: #{tpu_custom_call.1} parent=15 // pred_region
          %p447 = scmp.lt.s32.totalorder %s30, 1
          %s448 = scalar_select %p447, %s30, 1
          %s449 = smul.addr %s448, 8
          %s450 = scalar_lea.vmem %s0, %s449
        $region20: #{tpu_custom_call.1} parent=15 // pred_fallthru
          _
        // Predicated region
        $region21: #{tpu_custom_call.1} parent=15 // pred_check
          %p451 = pneg %p81
        $region22: #{tpu_custom_call.1} parent=15 // pred_check_branch
          %453 = sbr.rel (%p451) target = $region24
        $region23: #{tpu_custom_call.1} parent=15 // pred_region
          %p454 = scmp.lt.s32.totalorder %s31, 1
          %s455 = scalar_select %p454, %s31, 1
          %s456 = scalar_lea.vmem %s1, %s455
        $region24: #{tpu_custom_call.1} parent=15 // pred_fallthru
          _
        // Predicated region
        $region25: #{tpu_custom_call.1} parent=15 // pred_check
          %p457 = pneg %p107
        $region26: #{tpu_custom_call.1} parent=15 // pred_check_branch
          %459 = sbr.rel (%p457) target = $region28
        $region27: #{tpu_custom_call.1} parent=15 // pred_region
          %p460 = scmp.lt.s32.totalorder %s31, 1
          %s461 = scalar_select %p460, %s31, 1
          %s462 = scalar_lea.vmem %s2, %s461
        $region28: #{tpu_custom_call.1} parent=15 // pred_fallthru
          _
        // Predicated region
        $region29: #{tpu_custom_call.1} parent=15 // pred_check
          %p463 = pneg %p133
        $region30: #{tpu_custom_call.1} parent=15 // pred_check_branch
          %465 = sbr.rel (%p463) target = $region32
        $region31: #{tpu_custom_call.1} parent=15 // pred_region
          %p466 = scmp.lt.s32.totalorder %s31, 1
          %s467 = scalar_select %p466, %s31, 1
          %s468 = smul.addr %s467, 16
          %s469 = smul.addr %s468, 4
          %s470 = scalar_lea.vmem %s3, %s469
        $region32: #{tpu_custom_call.1} parent=15 // pred_fallthru
          _
        // Predicated region
        $region33: #{tpu_custom_call.1} parent=15 // pred_check
          %p471 = pneg %p159
        $region34: #{tpu_custom_call.1} parent=15 // pred_check_branch
          %473 = sbr.rel (%p471) target = $region36
        $region35: #{tpu_custom_call.1} parent=15 // pred_region
          %p474 = scmp.lt.s32.totalorder %s31, 1
          %s475 = scalar_select %p474, %s31, 1
          %s476 = smul.addr %s475, 16
          %s477 = smul.addr %s476, 4
          %s478 = scalar_lea.vmem %s4, %s477
        $region36: #{tpu_custom_call.1} parent=15 // pred_fallthru
          _
        // Predicated region
        $region37: #{tpu_custom_call.1} parent=15 // pred_check
          %p479 = pneg %p185
        $region38: #{tpu_custom_call.1} parent=15 // pred_check_branch
          %481 = sbr.rel (%p479) target = $region40
        $region39: #{tpu_custom_call.1} parent=15 // pred_region
          %p482 = scmp.lt.s32.totalorder %s31, 1
          %s483 = scalar_select %p482, %s31, 1
          %s484 = smul.addr %s483, 16
          %s485 = smul.addr %s484, 4
          %s486 = scalar_lea.vmem %s5, %s485
        $region40: #{tpu_custom_call.1} parent=15 // pred_fallthru
          _
        // Predicated region
        $region41: #{tpu_custom_call.1} parent=15 // pred_check
          %p487 = pneg %p211
        $region42: #{tpu_custom_call.1} parent=15 // pred_check_branch
          %489 = sbr.rel (%p487) target = $region44
        $region43: #{tpu_custom_call.1} parent=15 // pred_region
          %p490 = scmp.lt.s32.totalorder %s31, 1
          %s491 = scalar_select %p490, %s31, 1
          %s492 = smul.addr %s491, 4
          %s493 = smul.addr %s492, 4
          %s494 = scalar_lea.vmem %s6, %s493
        $region44: #{tpu_custom_call.1} parent=15 // pred_fallthru
          _
        // Predicated region
        $region45: #{tpu_custom_call.1} parent=15 // pred_check
          %p495 = pneg %p237
        $region46: #{tpu_custom_call.1} parent=15 // pred_check_branch
          %497 = sbr.rel (%p495) target = $region48
        $region47: #{tpu_custom_call.1} parent=15 // pred_region
          %p498 = scmp.lt.s32.totalorder %s31, 1
          %s499 = scalar_select %p498, %s31, 1
          %s500 = scalar_lea.vmem %s7, %s499
        $region48: #{tpu_custom_call.1} parent=15 // pred_fallthru
          _
        // Predicated region
        $region49: #{tpu_custom_call.1} parent=15 // pred_check
          %p501 = pneg %p263
        $region50: #{tpu_custom_call.1} parent=15 // pred_check_branch
          %503 = sbr.rel (%p501) target = $region52
        $region51: #{tpu_custom_call.1} parent=15 // pred_region
          %p504 = scmp.lt.s32.totalorder %s31, 1
          %s505 = scalar_select %p504, %s31, 1
          %s506 = scalar_lea.vmem %s8, %s505
        $region52: #{tpu_custom_call.1} parent=15 // pred_fallthru
          _
        // Predicated region
        $region53: #{tpu_custom_call.1} parent=15 // pred_check
          %p507 = pneg %p289
        $region54: #{tpu_custom_call.1} parent=15 // pred_check_branch
          %509 = sbr.rel (%p507) target = $region56
        $region55: #{tpu_custom_call.1} parent=15 // pred_region
          %p510 = scmp.lt.s32.totalorder %s31, 1
          %s511 = scalar_select %p510, %s31, 1
          %s512 = scalar_lea.vmem %s9, %s511
        $region56: #{tpu_custom_call.1} parent=15 // pred_fallthru
          _
        // Predicated region
        $region57: #{tpu_custom_call.1} parent=15 // pred_check
          %p513 = pneg %p315
        $region58: #{tpu_custom_call.1} parent=15 // pred_check_branch
          %515 = sbr.rel (%p513) target = $region60
        $region59: #{tpu_custom_call.1} parent=15 // pred_region
          %p516 = scmp.lt.s32.totalorder %s31, 1
          %s517 = scalar_select %p516, %s31, 1
          %s518 = smul.addr %s517, 4
          %s519 = smul.addr %s518, 4
          %s520 = scalar_lea.vmem %s10, %s519
        $region60: #{tpu_custom_call.1} parent=15 // pred_fallthru
          _
        // Predicated region
        $region61: #{tpu_custom_call.1} parent=15 // pred_check
          %p521 = pneg %p341
        $region62: #{tpu_custom_call.1} parent=15 // pred_check_branch
          %523 = sbr.rel (%p521) target = $region64
        $region63: #{tpu_custom_call.1} parent=15 // pred_region
          %p524 = scmp.lt.s32.totalorder %s31, 1
          %s525 = scalar_select %p524, %s31, 1
          %s526 = scalar_lea.vmem %s11, %s525
        $region64: #{tpu_custom_call.1} parent=15 // pred_fallthru
          _
        // Predicated region
        $region65: #{tpu_custom_call.1} parent=15 // pred_check
          %p527 = pneg %p367
        $region66: #{tpu_custom_call.1} parent=15 // pred_check_branch
          %529 = sbr.rel (%p527) target = $region68
        $region67: #{tpu_custom_call.1} parent=15 // pred_region
          %p530 = scmp.lt.s32.totalorder %s31, 1
          %s531 = scalar_select %p530, %s31, 1
          %s532 = smul.addr %s531, 8
          %s533 = smul.addr %s532, 4
          %s534 = scalar_lea.vmem %s12, %s533
        $region68: #{tpu_custom_call.1} parent=15 // pred_fallthru
          _
        // Predicated region
        $region69: #{tpu_custom_call.1} parent=15 // pred_check
          %p535 = pneg %p393
        $region70: #{tpu_custom_call.1} parent=15 // pred_check_branch
          %537 = sbr.rel (%p535) target = $region72
        $region71: #{tpu_custom_call.1} parent=15 // pred_region
          %p538 = scmp.lt.s32.totalorder %s31, 1
          %s539 = scalar_select %p538, %s31, 1
          %s540 = scalar_lea.vmem %s13, %s539
        $region72: #{tpu_custom_call.1} parent=15 // pred_fallthru
          _
      $region16: #{tpu_custom_call.1} parent=5 // pred_fallthru
        _
      %p541 = scmp.le.s32.totalorder 1, %s23
      %p542 = scmp.lt.s32.totalorder %s23, 5
      %p543 = pnand %p541, %p542
      %p544 = pneg %p543
      // Predicated region
      $region73: #{tpu_custom_call.1} parent=5 // pred_check
        _
      $region74: #{tpu_custom_call.1} parent=5 // pred_check_branch
        %546 = sbr.rel (%p543) target = $region76
      $region75: #{tpu_custom_call.1} parent=5 // pred_region
        %s547 = ssub.s32 %s23, 1
        %p548 = scmp.lt.s32.totalorder %s32, 1
        %s549 = scalar_select %p548, %s32, 1
        %s550 = smul.addr %s549, 8
        %s551 = scalar_lea.vmem %s0, %s550
        %p552 = pneg %p61
        %p553 = pneg %p58
        %p554 = scmp.lt.s32.totalorder %s33, 1
        %s555 = scalar_select %p554, %s33, 1
        %s556 = scalar_lea.vmem %s1, %s555
        %p557 = pneg %p87
        %p558 = pneg %p84
        %p559 = scmp.lt.s32.totalorder %s33, 1
        %s560 = scalar_select %p559, %s33, 1
        %s561 = scalar_lea.vmem %s2, %s560
        %p562 = pneg %p113
        %p563 = pneg %p110
        %p564 = scmp.lt.s32.totalorder %s33, 1
        %s565 = scalar_select %p564, %s33, 1
        %s566 = smul.addr %s565, 16
        %s567 = smul.addr %s566, 4
        %s568 = scalar_lea.vmem %s3, %s567
        %p569 = pneg %p139
        %p570 = pneg %p136
        %p571 = scmp.lt.s32.totalorder %s33, 1
        %s572 = scalar_select %p571, %s33, 1
        %s573 = smul.addr %s572, 16
        %s574 = smul.addr %s573, 4
        %s575 = scalar_lea.vmem %s4, %s574
        %p576 = pneg %p165
        %p577 = pneg %p162
        %p578 = scmp.lt.s32.totalorder %s33, 1
        %s579 = scalar_select %p578, %s33, 1
        %s580 = smul.addr %s579, 16
        %s581 = smul.addr %s580, 4
        %s582 = scalar_lea.vmem %s5, %s581
        %p583 = pneg %p191
        %p584 = pneg %p188
        %p585 = scmp.lt.s32.totalorder %s33, 1
        %s586 = scalar_select %p585, %s33, 1
        %s587 = smul.addr %s586, 4
        %s588 = smul.addr %s587, 4
        %s589 = scalar_lea.vmem %s6, %s588
        %p590 = pneg %p217
        %p591 = pneg %p214
        %p592 = scmp.lt.s32.totalorder %s33, 1
        %s593 = scalar_select %p592, %s33, 1
        %s594 = scalar_lea.vmem %s7, %s593
        %p595 = pneg %p243
        %p596 = pneg %p240
        %p597 = scmp.lt.s32.totalorder %s33, 1
        %s598 = scalar_select %p597, %s33, 1
        %s599 = scalar_lea.vmem %s8, %s598
        %p600 = pneg %p269
        %p601 = pneg %p266
        %p602 = scmp.lt.s32.totalorder %s33, 1
        %s603 = scalar_select %p602, %s33, 1
        %s604 = scalar_lea.vmem %s9, %s603
        %p605 = pneg %p295
        %p606 = pneg %p292
        %p607 = scmp.lt.s32.totalorder %s33, 1
        %s608 = scalar_select %p607, %s33, 1
        %s609 = smul.addr %s608, 4
        %s610 = smul.addr %s609, 4
        %s611 = scalar_lea.vmem %s10, %s610
        %p612 = pneg %p321
        %p613 = pneg %p318
        %p614 = scmp.lt.s32.totalorder %s33, 1
        %s615 = scalar_select %p614, %s33, 1
        %s616 = scalar_lea.vmem %s11, %s615
        %p617 = pneg %p347
        %p618 = pneg %p344
        %p619 = scmp.lt.s32.totalorder %s33, 1
        %s620 = scalar_select %p619, %s33, 1
        %s621 = smul.addr %s620, 8
        %s622 = smul.addr %s621, 4
        %s623 = scalar_lea.vmem %s12, %s622
        %p624 = pneg %p373
        %p625 = pneg %p370
        %p626 = scmp.lt.s32.totalorder %s33, 1
        %s627 = scalar_select %p626, %s33, 1
        %s628 = scalar_lea.vmem %s13, %s627
        %p629 = pneg %p399
        %p630 = pneg %p396
        %p631 = pneg %p425
        %p632 = pneg %p422
        %s633 = sand.u32 %s412, 1
        %s634 = scalar_lea.sflag [#allocation4], %s633
        %s635 = sand.u32 %s412, 1
        %s636 = smul.addr %s635, 8
        %s637 = scalar_lea.vmem [#allocation3], %s636
        %p638 = scmp.lt.s32.totalorder %s32, 1
        %s639 = scalar_select %p638, %s32, 1
        %s640 = smul.addr %s639, 8
        %s641 = scalar_lea.vmem %s0, %s640
        %p642 = scmp.lt.s32.totalorder %s33, 1
        %s643 = scalar_select %p642, %s33, 1
        %s644 = scalar_lea.vmem %s1, %s643
        %p645 = scmp.lt.s32.totalorder %s33, 1
        %s646 = scalar_select %p645, %s33, 1
        %s647 = scalar_lea.vmem %s2, %s646
        %p648 = scmp.lt.s32.totalorder %s33, 1
        %s649 = scalar_select %p648, %s33, 1
        %s650 = smul.addr %s649, 16
        %s651 = smul.addr %s650, 4
        %s652 = scalar_lea.vmem %s3, %s651
        %p653 = scmp.lt.s32.totalorder %s33, 1
        %s654 = scalar_select %p653, %s33, 1
        %s655 = smul.addr %s654, 16
        %s656 = smul.addr %s655, 4
        %s657 = scalar_lea.vmem %s4, %s656
        %p658 = scmp.lt.s32.totalorder %s33, 1
        %s659 = scalar_select %p658, %s33, 1
        %s660 = smul.addr %s659, 16
        %s661 = smul.addr %s660, 4
        %s662 = scalar_lea.vmem %s5, %s661
        %p663 = scmp.lt.s32.totalorder %s33, 1
        %s664 = scalar_select %p663, %s33, 1
        %s665 = smul.addr %s664, 4
        %s666 = smul.addr %s665, 4
        %s667 = scalar_lea.vmem %s6, %s666
        %p668 = scmp.lt.s32.totalorder %s33, 1
        %s669 = scalar_select %p668, %s33, 1
        %s670 = scalar_lea.vmem %s7, %s669
        %p671 = scmp.lt.s32.totalorder %s33, 1
        %s672 = scalar_select %p671, %s33, 1
        %s673 = scalar_lea.vmem %s8, %s672
        %p674 = scmp.lt.s32.totalorder %s33, 1
        %s675 = scalar_select %p674, %s33, 1
        %s676 = scalar_lea.vmem %s9, %s675
        %p677 = scmp.lt.s32.totalorder %s33, 1
        %s678 = scalar_select %p677, %s33, 1
        %s679 = smul.addr %s678, 4
        %s680 = smul.addr %s679, 4
        %s681 = scalar_lea.vmem %s10, %s680
        %p682 = scmp.lt.s32.totalorder %s33, 1
        %s683 = scalar_select %p682, %s33, 1
        %s684 = scalar_lea.vmem %s11, %s683
        %p685 = scmp.lt.s32.totalorder %s33, 1
        %s686 = scalar_select %p685, %s33, 1
        %s687 = smul.addr %s686, 8
        %s688 = smul.addr %s687, 4
        %s689 = scalar_lea.vmem %s12, %s688
        %p690 = scmp.lt.s32.totalorder %s33, 1
        %s691 = scalar_select %p690, %s33, 1
        %s692 = scalar_lea.vmem %s13, %s691
        %p694 = scmp.eq.s32.totalorder %s33, 0
        // Predicated region
        $region77: #{tpu_custom_call.1} parent=75 // pred_check
          %p695 = pneg %p694
        $region78: #{tpu_custom_call.1} parent=75 // pred_check_branch
          %697 = sbr.rel (%p695) target = $region80
        $region79: #{tpu_custom_call.1} parent=75 // pred_region
          %v698 = vld [vmem:[%s641] sm:$0xff]
          %vm699 = vcmask 261120
          %700 = vst.msk [vmem:[#allocation2] sm:$0xff] %vm699, %v698
        $region80: #{tpu_custom_call.1} parent=75 // pred_fallthru
          _
        %v701 = vld [vmem:[#allocation2] sm:$0xff]
        %v702 = vld [vmem:[%s644] sm:$0x1]
        %v703 = vld [vmem:[%s647] sm:$0x1]
        %vm704 = vcmask 261120
        %v705 = vsel %vm704, %v701, 0.0
        %706 = vadd.xlane.f32.xlu0 %v705
        %v707 = vpop.xlane.xlu0 %706
        %v708 = vrcp.pop 32.0
        %v709 = vmul.f32 %v707, %v708
        %v710 = vsub.f32 %v701, %v709
        %v711 = vmul.f32 %v710, %v710
        %v712 = vsel %vm704, %v711, 0.0
        %713 = vadd.xlane.f32.xlu0 %v712
        %v714 = vpop.xlane.xlu0 %713
        %v715 = vmul.f32 %v714, %v708
        %v716 = vadd.f32 %v715, 1e-05
        %v717 = vrsqrt.pop %v716
        %v718 = vmul.f32 %v710, %v717
        %v720 = vlaneseq
        %v721 = vshrl.u32 %v720, 7
        %v722 = vsub.s32 0, %v721
        %v723 = vrot.slane %v702, %v722
        %v725 = vmul.f32 %v718, %v723
        %v727 = vlaneseq
        %v728 = vshrl.u32 %v727, 7
        %v729 = vsub.s32 0, %v728
        %v730 = vrot.slane %v703, %v729
        %v732 = vadd.f32 %v725, %v730
        %v733 = vpack.c.bf16 %v732, %v732
        %v734 = vld [vmem:[%s652] sm:$0xf]
        %v735 = vld [vmem:[%s652 + $0x4] sm:$0xf]
        %v736 = vld [vmem:[%s652 + $0x8] sm:$0xf]
        %v737 = vld [vmem:[%s652 + $0xc] sm:$0xf]
        %v742 = vunpack.c.l.b16 %v734
        %v743 = vunpack.c.l.b16 %v735
        %v744 = vunpack.c.l.b16 %v736
        %v745 = vunpack.c.l.b16 %v737
        %v746 = vpack.c.b16 %v743, %v742
        %v747 = vpack.c.b16 %v745, %v744
        %v751 = vsel %vm704, %v733, 0
        %753 = vmatprep.subr.bf16.mxu0 0
        %754 = vmatpush1.bf16.msra.mxu0 %v746
        %755 = vmatprep.subr.bf16.mxu0 0
        %756 = vmatpush1.bf16.msra.mxu0 %v747
        %757 = vmatprep.subr.bf16.mxu0 0
        %758 = vmatpush1.bf16.msra.mxu0 0
        %759 = vmatprep.subr.bf16.mxu0 0
        %760 = vmatpush1.bf16.msra.mxu0 0
        %761 = vmatprep.subr.bf16.mxu0 0
        %762 = vmatpush1.bf16.msra.mxu0 0
        %763 = vmatprep.subr.bf16.mxu0 0
        %764 = vmatpush1.bf16.msra.mxu0 0
        %765 = vmatprep.subr.bf16.mxu0 0
        %766 = vmatpush1.bf16.msra.mxu0 0
        %767 = vmatprep.subr.bf16.mxu0 0
        %768 = vmatpush1.bf16.msra.mxu0 0
        %769 = vmatprep.subr.bf16.mxu0 0
        %770 = vmatpush1.bf16.msra.mxu0 0
        %771 = vmatprep.subr.bf16.mxu0 0
        %772 = vmatpush1.bf16.msra.mxu0 0
        %773 = vmatprep.subr.bf16.mxu0 0
        %774 = vmatpush1.bf16.msra.mxu0 0
        %775 = vmatprep.subr.bf16.mxu0 0
        %776 = vmatpush1.bf16.msra.mxu0 0
        %777 = vmatprep.subr.bf16.mxu0 0
        %778 = vmatpush1.bf16.msra.mxu0 0
        %779 = vmatprep.subr.bf16.mxu0 0
        %780 = vmatpush1.bf16.msra.mxu0 0
        %781 = vmatprep.subr.bf16.mxu0 0
        %782 = vmatpush1.bf16.msra.mxu0 0
        %783 = vmatprep.subr.bf16.mxu0 0
        %784 = vmatpush1.bf16.msra.mxu0 0
        %785 = vmatprep.mubr.bf16.mxu0 0
        %786 = vmatmul.mubr.bf16.gmra.mrb[0].mxu0 %v751
        %v787 = vpop.f32.mrb[0].mxu0
        %v788 = vadd.f32 0.0, %v787
        %v789 = vpop.f32.mrb[0].mxu0
        %v790 = vpop.f32.mrb[0].mxu0
        %v791 = vpop.f32.mrb[0].mxu0
        %792 = vdwg.mxu0
        %v793 = vld [vmem:[%s657] sm:$0xf]
        %v794 = vld [vmem:[%s657 + $0x4] sm:$0xf]
        %v795 = vld [vmem:[%s657 + $0x8] sm:$0xf]
        %v796 = vld [vmem:[%s657 + $0xc] sm:$0xf]
        %v801 = vunpack.c.l.b16 %v793
        %v802 = vunpack.c.l.b16 %v794
        %v803 = vunpack.c.l.b16 %v795
        %v804 = vunpack.c.l.b16 %v796
        %v805 = vpack.c.b16 %v802, %v801
        %v806 = vpack.c.b16 %v804, %v803
        %809 = vmatprep.subr.bf16.mxu0 0
        %810 = vmatpush1.bf16.msra.mxu0 %v805
        %811 = vmatprep.subr.bf16.mxu0 0
        %812 = vmatpush1.bf16.msra.mxu0 %v806
        %813 = vmatprep.subr.bf16.mxu0 0
        %814 = vmatpush1.bf16.msra.mxu0 0
        %815 = vmatprep.subr.bf16.mxu0 0
        %816 = vmatpush1.bf16.msra.mxu0 0
        %817 = vmatprep.subr.bf16.mxu0 0
        %818 = vmatpush1.bf16.msra.mxu0 0
        %819 = vmatprep.subr.bf16.mxu0 0
        %820 = vmatpush1.bf16.msra.mxu0 0
        %821 = vmatprep.subr.bf16.mxu0 0
        %822 = vmatpush1.bf16.msra.mxu0 0
        %823 = vmatprep.subr.bf16.mxu0 0
        %824 = vmatpush1.bf16.msra.mxu0 0
        %825 = vmatprep.subr.bf16.mxu0 0
        %826 = vmatpush1.bf16.msra.mxu0 0
        %827 = vmatprep.subr.bf16.mxu0 0
        %828 = vmatpush1.bf16.msra.mxu0 0
        %829 = vmatprep.subr.bf16.mxu0 0
        %830 = vmatpush1.bf16.msra.mxu0 0
        %831 = vmatprep.subr.bf16.mxu0 0
        %832 = vmatpush1.bf16.msra.mxu0 0
        %833 = vmatprep.subr.bf16.mxu0 0
        %834 = vmatpush1.bf16.msra.mxu0 0
        %835 = vmatprep.subr.bf16.mxu0 0
        %836 = vmatpush1.bf16.msra.mxu0 0
        %837 = vmatprep.subr.bf16.mxu0 0
        %838 = vmatpush1.bf16.msra.mxu0 0
        %839 = vmatprep.subr.bf16.mxu0 0
        %840 = vmatpush1.bf16.msra.mxu0 0
        %841 = vmatprep.mubr.bf16.mxu0 0
        %842 = vmatmul.mubr.bf16.gmra.mrb[0].mxu0 %v751
        %v843 = vpop.f32.mrb[0].mxu0
        %v844 = vadd.f32 0.0, %v843
        %v845 = vpop.f32.mrb[0].mxu0
        %v846 = vpop.f32.mrb[0].mxu0
        %v847 = vpop.f32.mrb[0].mxu0
        %848 = vdwg.mxu0
        %v849 = vld [vmem:[%s662] sm:$0xf]
        %v850 = vld [vmem:[%s662 + $0x4] sm:$0xf]
        %v851 = vld [vmem:[%s662 + $0x8] sm:$0xf]
        %v852 = vld [vmem:[%s662 + $0xc] sm:$0xf]
        %v857 = vunpack.c.l.b16 %v849
        %v858 = vunpack.c.l.b16 %v850
        %v859 = vunpack.c.l.b16 %v851
        %v860 = vunpack.c.l.b16 %v852
        %v861 = vpack.c.b16 %v858, %v857
        %v862 = vpack.c.b16 %v860, %v859
        %865 = vmatprep.subr.bf16.mxu0 0
        %866 = vmatpush1.bf16.msra.mxu0 %v861
        %867 = vmatprep.subr.bf16.mxu0 0
        %868 = vmatpush1.bf16.msra.mxu0 %v862
        %869 = vmatprep.subr.bf16.mxu0 0
        %870 = vmatpush1.bf16.msra.mxu0 0
        %871 = vmatprep.subr.bf16.mxu0 0
        %872 = vmatpush1.bf16.msra.mxu0 0
        %873 = vmatprep.subr.bf16.mxu0 0
        %874 = vmatpush1.bf16.msra.mxu0 0
        %875 = vmatprep.subr.bf16.mxu0 0
        %876 = vmatpush1.bf16.msra.mxu0 0
        %877 = vmatprep.subr.bf16.mxu0 0
        %878 = vmatpush1.bf16.msra.mxu0 0
        %879 = vmatprep.subr.bf16.mxu0 0
        %880 = vmatpush1.bf16.msra.mxu0 0
        %881 = vmatprep.subr.bf16.mxu0 0
        %882 = vmatpush1.bf16.msra.mxu0 0
        %883 = vmatprep.subr.bf16.mxu0 0
        %884 = vmatpush1.bf16.msra.mxu0 0
        %885 = vmatprep.subr.bf16.mxu0 0
        %886 = vmatpush1.bf16.msra.mxu0 0
        %887 = vmatprep.subr.bf16.mxu0 0
        %888 = vmatpush1.bf16.msra.mxu0 0
        %889 = vmatprep.subr.bf16.mxu0 0
        %890 = vmatpush1.bf16.msra.mxu0 0
        %891 = vmatprep.subr.bf16.mxu0 0
        %892 = vmatpush1.bf16.msra.mxu0 0
        %893 = vmatprep.subr.bf16.mxu0 0
        %894 = vmatpush1.bf16.msra.mxu0 0
        %895 = vmatprep.subr.bf16.mxu0 0
        %896 = vmatpush1.bf16.msra.mxu0 0
        %897 = vmatprep.mubr.bf16.mxu0 0
        %898 = vmatmul.mubr.bf16.gmra.mrb[0].mxu0 %v751
        %v899 = vpop.f32.mrb[0].mxu0
        %v900 = vadd.f32 0.0, %v899
        %v901 = vpop.f32.mrb[0].mxu0
        %v902 = vpop.f32.mrb[0].mxu0
        %v903 = vpop.f32.mrb[0].mxu0
        %904 = vdwg.mxu0
        %v905 = vpack.c.bf16 %v788, %v788
        %v906 = vpack.c.bf16 %v844, %v844
        %vm907 = vcmask 64512
        %v909 = vsel %vm907, %v905, 0
        %v912 = vsel %vm907, %v906, 0
        %914 = vmatprep.subr.bf16.mxu0 0
        %915 = vmatpush1.bf16.xpose.msra.mxu0 %v912
        %916 = vmatprep.subr.bf16.mxu0 0
        %917 = vmatpush1.bf16.xpose.msra.mxu0 0
        %918 = vmatprep.subr.bf16.mxu0 0
        %919 = vmatpush1.bf16.xpose.msra.mxu0 0
        %920 = vmatprep.subr.bf16.mxu0 0
        %921 = vmatpush1.bf16.xpose.msra.mxu0 0
        %922 = vmatprep.subr.bf16.mxu0 0
        %923 = vmatpush1.bf16.xpose.msra.mxu0 0
        %924 = vmatprep.subr.bf16.mxu0 0
        %925 = vmatpush1.bf16.xpose.msra.mxu0 0
        %926 = vmatprep.subr.bf16.mxu0 0
        %927 = vmatpush1.bf16.xpose.msra.mxu0 0
        %928 = vmatprep.subr.bf16.mxu0 0
        %929 = vmatpush1.bf16.xpose.msra.mxu0 0
        %930 = vmatprep.subr.bf16.mxu0 0
        %931 = vmatpush1.bf16.xpose.msra.mxu0 0
        %932 = vmatprep.subr.bf16.mxu0 0
        %933 = vmatpush1.bf16.xpose.msra.mxu0 0
        %934 = vmatprep.subr.bf16.mxu0 0
        %935 = vmatpush1.bf16.xpose.msra.mxu0 0
        %936 = vmatprep.subr.bf16.mxu0 0
        %937 = vmatpush1.bf16.xpose.msra.mxu0 0
        %938 = vmatprep.subr.bf16.mxu0 0
        %939 = vmatpush1.bf16.xpose.msra.mxu0 0
        %940 = vmatprep.subr.bf16.mxu0 0
        %941 = vmatpush1.bf16.xpose.msra.mxu0 0
        %942 = vmatprep.subr.bf16.mxu0 0
        %943 = vmatpush1.bf16.xpose.msra.mxu0 0
        %944 = vmatprep.subr.bf16.mxu0 0
        %945 = vmatpush1.bf16.xpose.msra.mxu0 0
        %946 = vmatprep.mubr.bf16.mxu0 0
        %947 = vmatmul.mubr.bf16.gmra.mrb[0].mxu0 %v909
        %v948 = vpop.f32.mrb[0].mxu0
        %v949 = vadd.f32 0.0, %v948
        %v950 = vpop.f32.mrb[0].mxu0
        %v951 = vpop.f32.mrb[0].mxu0
        %v952 = vpop.f32.mrb[0].mxu0
        %953 = vdwg.mxu0
        %v954 = vmul.f32 %v949, 0.35355338
        %v955 = vsel %vm907, %v954, -inf
        %956 = vmax.xlane.f32.xlu0 %v955
        %v957 = vpop.xlane.xlu0 %956
        %v958 = vsub.f32 %v954, %v957
        %v959 = vmul.f32 %v958, 1.442695
        %v960 = vpow.pop %v959
        %v961 = vsel %vm907, %v960, 0.0
        %962 = vadd.xlane.f32.xlu0 %v961
        %v963 = vpop.xlane.xlu0 %962
        %v964 = vrcp.pop %v963
        %v965 = vmul.f32 %v960, %v964
        %v966 = vpack.c.bf16 %v965, %v965
        %v967 = vpack.c.bf16 %v900, %v900
        %v969 = vsel %vm907, %v966, 0
        %vm971 = vcmask 1043456
        %v973 = vsel %vm971, %v967, 0
        %975 = vmatprep.subr.bf16.mxu0 0
        %976 = vmatpush1.bf16.msra.mxu0 %v973
        %977 = vmatprep.subr.bf16.mxu0 0
        %978 = vmatpush1.bf16.msra.mxu0 0
        %979 = vmatprep.subr.bf16.mxu0 0
        %980 = vmatpush1.bf16.msra.mxu0 0
        %981 = vmatprep.subr.bf16.mxu0 0
        %982 = vmatpush1.bf16.msra.mxu0 0
        %983 = vmatprep.subr.bf16.mxu0 0
        %984 = vmatpush1.bf16.msra.mxu0 0
        %985 = vmatprep.subr.bf16.mxu0 0
        %986 = vmatpush1.bf16.msra.mxu0 0
        %987 = vmatprep.subr.bf16.mxu0 0
        %988 = vmatpush1.bf16.msra.mxu0 0
        %989 = vmatprep.subr.bf16.mxu0 0
        %990 = vmatpush1.bf16.msra.mxu0 0
        %991 = vmatprep.subr.bf16.mxu0 0
        %992 = vmatpush1.bf16.msra.mxu0 0
        %993 = vmatprep.subr.bf16.mxu0 0
        %994 = vmatpush1.bf16.msra.mxu0 0
        %995 = vmatprep.subr.bf16.mxu0 0
        %996 = vmatpush1.bf16.msra.mxu0 0
        %997 = vmatprep.subr.bf16.mxu0 0
        %998 = vmatpush1.bf16.msra.mxu0 0
        %999 = vmatprep.subr.bf16.mxu0 0
        %1000 = vmatpush1.bf16.msra.mxu0 0
        %1001 = vmatprep.subr.bf16.mxu0 0
        %1002 = vmatpush1.bf16.msra.mxu0 0
        %1003 = vmatprep.subr.bf16.mxu0 0
        %1004 = vmatpush1.bf16.msra.mxu0 0
        %1005 = vmatprep.subr.bf16.mxu0 0
        %1006 = vmatpush1.bf16.msra.mxu0 0
        %1007 = vmatprep.mubr.bf16.mxu0 0
        %1008 = vmatmul.mubr.bf16.gmra.mrb[0].mxu0 %v969
        %v1009 = vpop.f32.mrb[0].mxu0
        %v1010 = vadd.f32 0.0, %v1009
        %v1011 = vpop.f32.mrb[0].mxu0
        %v1012 = vpop.f32.mrb[0].mxu0
        %v1013 = vpop.f32.mrb[0].mxu0
        %1014 = vdwg.mxu0
        %v1015 = vpack.c.bf16 %v1010, %v1010
        %v1016 = vld [vmem:[%s667] sm:$0xf]
        %s1017 = scalar_lea.vmem %s652, 16
        %v1018 = vld [vmem:[%s1017] sm:$0xf]
        %v1019 = vld [vmem:[%s1017 + $0x4] sm:$0xf]
        %v1020 = vld [vmem:[%s1017 + $0x8] sm:$0xf]
        %v1021 = vld [vmem:[%s1017 + $0xc] sm:$0xf]
        %v1026 = vunpack.c.l.b16 %v1018
        %v1027 = vunpack.c.l.b16 %v1019
        %v1028 = vunpack.c.l.b16 %v1020
        %v1029 = vunpack.c.l.b16 %v1021
        %v1030 = vpack.c.b16 %v1027, %v1026
        %v1031 = vpack.c.b16 %v1029, %v1028
        %1034 = vmatprep.subr.bf16.mxu0 0
        %1035 = vmatpush1.bf16.msra.mxu0 %v1030
        %1036 = vmatprep.subr.bf16.mxu0 0
        %1037 = vmatpush1.bf16.msra.mxu0 %v1031
        %1038 = vmatprep.subr.bf16.mxu0 0
        %1039 = vmatpush1.bf16.msra.mxu0 0
        %1040 = vmatprep.subr.bf16.mxu0 0
        %1041 = vmatpush1.bf16.msra.mxu0 0
        %1042 = vmatprep.subr.bf16.mxu0 0
        %1043 = vmatpush1.bf16.msra.mxu0 0
        %1044 = vmatprep.subr.bf16.mxu0 0
        %1045 = vmatpush1.bf16.msra.mxu0 0
        %1046 = vmatprep.subr.bf16.mxu0 0
        %1047 = vmatpush1.bf16.msra.mxu0 0
        %1048 = vmatprep.subr.bf16.mxu0 0
        %1049 = vmatpush1.bf16.msra.mxu0 0
        %1050 = vmatprep.subr.bf16.mxu0 0
        %1051 = vmatpush1.bf16.msra.mxu0 0
        %1052 = vmatprep.subr.bf16.mxu0 0
        %1053 = vmatpush1.bf16.msra.mxu0 0
        %1054 = vmatprep.subr.bf16.mxu0 0
        %1055 = vmatpush1.bf16.msra.mxu0 0
        %1056 = vmatprep.subr.bf16.mxu0 0
        %1057 = vmatpush1.bf16.msra.mxu0 0
        %1058 = vmatprep.subr.bf16.mxu0 0
        %1059 = vmatpush1.bf16.msra.mxu0 0
        %1060 = vmatprep.subr.bf16.mxu0 0
        %1061 = vmatpush1.bf16.msra.mxu0 0
        %1062 = vmatprep.subr.bf16.mxu0 0
        %1063 = vmatpush1.bf16.msra.mxu0 0
        %1064 = vmatprep.subr.bf16.mxu0 0
        %1065 = vmatpush1.bf16.msra.mxu0 0
        %1066 = vmatprep.mubr.bf16.mxu0 0
        %1067 = vmatmul.mubr.bf16.gmra.mrb[0].mxu0 %v751
        %v1068 = vpop.f32.mrb[0].mxu0
        %v1069 = vadd.f32 0.0, %v1068
        %v1070 = vpop.f32.mrb[0].mxu0
        %v1071 = vpop.f32.mrb[0].mxu0
        %v1072 = vpop.f32.mrb[0].mxu0
        %1073 = vdwg.mxu0
        %s1074 = scalar_lea.vmem %s657, 16
        %v1075 = vld [vmem:[%s1074] sm:$0xf]
        %v1076 = vld [vmem:[%s1074 + $0x4] sm:$0xf]
        %v1077 = vld [vmem:[%s1074 + $0x8] sm:$0xf]
        %v1078 = vld [vmem:[%s1074 + $0xc] sm:$0xf]
        %v1083 = vunpack.c.l.b16 %v1075
        %v1084 = vunpack.c.l.b16 %v1076
        %v1085 = vunpack.c.l.b16 %v1077
        %v1086 = vunpack.c.l.b16 %v1078
        %v1087 = vpack.c.b16 %v1084, %v1083
        %v1088 = vpack.c.b16 %v1086, %v1085
        %1091 = vmatprep.subr.bf16.mxu0 0
        %1092 = vmatpush1.bf16.msra.mxu0 %v1087
        %1093 = vmatprep.subr.bf16.mxu0 0
        %1094 = vmatpush1.bf16.msra.mxu0 %v1088
        %1095 = vmatprep.subr.bf16.mxu0 0
        %1096 = vmatpush1.bf16.msra.mxu0 0
        %1097 = vmatprep.subr.bf16.mxu0 0
        %1098 = vmatpush1.bf16.msra.mxu0 0
        %1099 = vmatprep.subr.bf16.mxu0 0
        %1100 = vmatpush1.bf16.msra.mxu0 0
        %1101 = vmatprep.subr.bf16.mxu0 0
        %1102 = vmatpush1.bf16.msra.mxu0 0
        %1103 = vmatprep.subr.bf16.mxu0 0
        %1104 = vmatpush1.bf16.msra.mxu0 0
        %1105 = vmatprep.subr.bf16.mxu0 0
        %1106 = vmatpush1.bf16.msra.mxu0 0
        %1107 = vmatprep.subr.bf16.mxu0 0
        %1108 = vmatpush1.bf16.msra.mxu0 0
        %1109 = vmatprep.subr.bf16.mxu0 0
        %1110 = vmatpush1.bf16.msra.mxu0 0
        %1111 = vmatprep.subr.bf16.mxu0 0
        %1112 = vmatpush1.bf16.msra.mxu0 0
        %1113 = vmatprep.subr.bf16.mxu0 0
        %1114 = vmatpush1.bf16.msra.mxu0 0
        %1115 = vmatprep.subr.bf16.mxu0 0
        %1116 = vmatpush1.bf16.msra.mxu0 0
        %1117 = vmatprep.subr.bf16.mxu0 0
        %1118 = vmatpush1.bf16.msra.mxu0 0
        %1119 = vmatprep.subr.bf16.mxu0 0
        %1120 = vmatpush1.bf16.msra.mxu0 0
        %1121 = vmatprep.subr.bf16.mxu0 0
        %1122 = vmatpush1.bf16.msra.mxu0 0
        %1123 = vmatprep.mubr.bf16.mxu0 0
        %1124 = vmatmul.mubr.bf16.gmra.mrb[0].mxu0 %v751
        %v1125 = vpop.f32.mrb[0].mxu0
        %v1126 = vadd.f32 0.0, %v1125
        %v1127 = vpop.f32.mrb[0].mxu0
        %v1128 = vpop.f32.mrb[0].mxu0
        %v1129 = vpop.f32.mrb[0].mxu0
        %1130 = vdwg.mxu0
        %s1131 = scalar_lea.vmem %s662, 16
        %v1132 = vld [vmem:[%s1131] sm:$0xf]
        %v1133 = vld [vmem:[%s1131 + $0x4] sm:$0xf]
        %v1134 = vld [vmem:[%s1131 + $0x8] sm:$0xf]
        %v1135 = vld [vmem:[%s1131 + $0xc] sm:$0xf]
        %v1140 = vunpack.c.l.b16 %v1132
        %v1141 = vunpack.c.l.b16 %v1133
        %v1142 = vunpack.c.l.b16 %v1134
        %v1143 = vunpack.c.l.b16 %v1135
        %v1144 = vpack.c.b16 %v1141, %v1140
        %v1145 = vpack.c.b16 %v1143, %v1142
        %1148 = vmatprep.subr.bf16.mxu0 0
        %1149 = vmatpush1.bf16.msra.mxu0 %v1144
        %1150 = vmatprep.subr.bf16.mxu0 0
        %1151 = vmatpush1.bf16.msra.mxu0 %v1145
        %1152 = vmatprep.subr.bf16.mxu0 0
        %1153 = vmatpush1.bf16.msra.mxu0 0
        %1154 = vmatprep.subr.bf16.mxu0 0
        %1155 = vmatpush1.bf16.msra.mxu0 0
        %1156 = vmatprep.subr.bf16.mxu0 0
        %1157 = vmatpush1.bf16.msra.mxu0 0
        %1158 = vmatprep.subr.bf16.mxu0 0
        %1159 = vmatpush1.bf16.msra.mxu0 0
        %1160 = vmatprep.subr.bf16.mxu0 0
        %1161 = vmatpush1.bf16.msra.mxu0 0
        %1162 = vmatprep.subr.bf16.mxu0 0
        %1163 = vmatpush1.bf16.msra.mxu0 0
        %1164 = vmatprep.subr.bf16.mxu0 0
        %1165 = vmatpush1.bf16.msra.mxu0 0
        %1166 = vmatprep.subr.bf16.mxu0 0
        %1167 = vmatpush1.bf16.msra.mxu0 0
        %1168 = vmatprep.subr.bf16.mxu0 0
        %1169 = vmatpush1.bf16.msra.mxu0 0
        %1170 = vmatprep.subr.bf16.mxu0 0
        %1171 = vmatpush1.bf16.msra.mxu0 0
        %1172 = vmatprep.subr.bf16.mxu0 0
        %1173 = vmatpush1.bf16.msra.mxu0 0
        %1174 = vmatprep.subr.bf16.mxu0 0
        %1175 = vmatpush1.bf16.msra.mxu0 0
        %1176 = vmatprep.subr.bf16.mxu0 0
        %1177 = vmatpush1.bf16.msra.mxu0 0
        %1178 = vmatprep.subr.bf16.mxu0 0
        %1179 = vmatpush1.bf16.msra.mxu0 0
        %1180 = vmatprep.mubr.bf16.mxu0 0
        %1181 = vmatmul.mubr.bf16.gmra.mrb[0].mxu0 %v751
        %v1182 = vpop.f32.mrb[0].mxu0
        %v1183 = vadd.f32 0.0, %v1182
        %v1184 = vpop.f32.mrb[0].mxu0
        %v1185 = vpop.f32.mrb[0].mxu0
        %v1186 = vpop.f32.mrb[0].mxu0
        %1187 = vdwg.mxu0
        %v1188 = vpack.c.bf16 %v1069, %v1069
        %v1189 = vpack.c.bf16 %v1126, %v1126
        %v1191 = vsel %vm907, %v1188, 0
        %v1194 = vsel %vm907, %v1189, 0
        %1196 = vmatprep.subr.bf16.mxu0 0
        %1197 = vmatpush1.bf16.xpose.msra.mxu0 %v1194
        %1198 = vmatprep.subr.bf16.mxu0 0
        %1199 = vmatpush1.bf16.xpose.msra.mxu0 0
        %1200 = vmatprep.subr.bf16.mxu0 0
        %1201 = vmatpush1.bf16.xpose.msra.mxu0 0
        %1202 = vmatprep.subr.bf16.mxu0 0
        %1203 = vmatpush1.bf16.xpose.msra.mxu0 0
        %1204 = vmatprep.subr.bf16.mxu0 0
        %1205 = vmatpush1.bf16.xpose.msra.mxu0 0
        %1206 = vmatprep.subr.bf16.mxu0 0
        %1207 = vmatpush1.bf16.xpose.msra.mxu0 0
        %1208 = vmatprep.subr.bf16.mxu0 0
        %1209 = vmatpush1.bf16.xpose.msra.mxu0 0
        %1210 = vmatprep.subr.bf16.mxu0 0
        %1211 = vmatpush1.bf16.xpose.msra.mxu0 0
        %1212 = vmatprep.subr.bf16.mxu0 0
        %1213 = vmatpush1.bf16.xpose.msra.mxu0 0
        %1214 = vmatprep.subr.bf16.mxu0 0
        %1215 = vmatpush1.bf16.xpose.msra.mxu0 0
        %1216 = vmatprep.subr.bf16.mxu0 0
        %1217 = vmatpush1.bf16.xpose.msra.mxu0 0
        %1218 = vmatprep.subr.bf16.mxu0 0
        %1219 = vmatpush1.bf16.xpose.msra.mxu0 0
        %1220 = vmatprep.subr.bf16.mxu0 0
        %1221 = vmatpush1.bf16.xpose.msra.mxu0 0
        %1222 = vmatprep.subr.bf16.mxu0 0
        %1223 = vmatpush1.bf16.xpose.msra.mxu0 0
        %1224 = vmatprep.subr.bf16.mxu0 0
        %1225 = vmatpush1.bf16.xpose.msra.mxu0 0
        %1226 = vmatprep.subr.bf16.mxu0 0
        %1227 = vmatpush1.bf16.xpose.msra.mxu0 0
        %1228 = vmatprep.mubr.bf16.mxu0 0
        %1229 = vmatmul.mubr.bf16.gmra.mrb[0].mxu0 %v1191
        %v1230 = vpop.f32.mrb[0].mxu0
        %v1231 = vadd.f32 0.0, %v1230
        %v1232 = vpop.f32.mrb[0].mxu0
        %v1233 = vpop.f32.mrb[0].mxu0
        %v1234 = vpop.f32.mrb[0].mxu0
        %1235 = vdwg.mxu0
        %v1236 = vmul.f32 %v1231, 0.35355338
        %v1237 = vsel %vm907, %v1236, -inf
        %1238 = vmax.xlane.f32.xlu0 %v1237
        %v1239 = vpop.xlane.xlu0 %1238
        %v1240 = vsub.f32 %v1236, %v1239
        %v1241 = vmul.f32 %v1240, 1.442695
        %v1242 = vpow.pop %v1241
        %v1243 = vsel %vm907, %v1242, 0.0
        %1244 = vadd.xlane.f32.xlu0 %v1243
        %v1245 = vpop.xlane.xlu0 %1244
        %v1246 = vrcp.pop %v1245
        %v1247 = vmul.f32 %v1242, %v1246
        %v1248 = vpack.c.bf16 %v1247, %v1247
        %v1249 = vpack.c.bf16 %v1183, %v1183
        %v1251 = vsel %vm907, %v1248, 0
        %v1254 = vsel %vm971, %v1249, 0
        %1256 = vmatprep.subr.bf16.mxu0 0
        %1257 = vmatpush1.bf16.msra.mxu0 %v1254
        %1258 = vmatprep.subr.bf16.mxu0 0
        %1259 = vmatpush1.bf16.msra.mxu0 0
        %1260 = vmatprep.subr.bf16.mxu0 0
        %1261 = vmatpush1.bf16.msra.mxu0 0
        %1262 = vmatprep.subr.bf16.mxu0 0
        %1263 = vmatpush1.bf16.msra.mxu0 0
        %1264 = vmatprep.subr.bf16.mxu0 0
        %1265 = vmatpush1.bf16.msra.mxu0 0
        %1266 = vmatprep.subr.bf16.mxu0 0
        %1267 = vmatpush1.bf16.msra.mxu0 0
        %1268 = vmatprep.subr.bf16.mxu0 0
        %1269 = vmatpush1.bf16.msra.mxu0 0
        %1270 = vmatprep.subr.bf16.mxu0 0
        %1271 = vmatpush1.bf16.msra.mxu0 0
        %1272 = vmatprep.subr.bf16.mxu0 0
        %1273 = vmatpush1.bf16.msra.mxu0 0
        %1274 = vmatprep.subr.bf16.mxu0 0
        %1275 = vmatpush1.bf16.msra.mxu0 0
        %1276 = vmatprep.subr.bf16.mxu0 0
        %1277 = vmatpush1.bf16.msra.mxu0 0
        %1278 = vmatprep.subr.bf16.mxu0 0
        %1279 = vmatpush1.bf16.msra.mxu0 0
        %1280 = vmatprep.subr.bf16.mxu0 0
        %1281 = vmatpush1.bf16.msra.mxu0 0
        %1282 = vmatprep.subr.bf16.mxu0 0
        %1283 = vmatpush1.bf16.msra.mxu0 0
        %1284 = vmatprep.subr.bf16.mxu0 0
        %1285 = vmatpush1.bf16.msra.mxu0 0
        %1286 = vmatprep.subr.bf16.mxu0 0
        %1287 = vmatpush1.bf16.msra.mxu0 0
        %1288 = vmatprep.mubr.bf16.mxu0 0
        %1289 = vmatmul.mubr.bf16.gmra.mrb[0].mxu0 %v1251
        %v1290 = vpop.f32.mrb[0].mxu0
        %v1291 = vadd.f32 0.0, %v1290
        %v1292 = vpop.f32.mrb[0].mxu0
        %v1293 = vpop.f32.mrb[0].mxu0
        %v1294 = vpop.f32.mrb[0].mxu0
        %1295 = vdwg.mxu0
        %v1296 = vpack.c.bf16 %v1291, %v1291
        %s1297 = scalar_lea.vmem %s667, 4
        %v1298 = vld [vmem:[%s1297] sm:$0xf]
        %v1300 = vsel %vm907, %v1296, 0
        %v1303 = vsel %vm971, %v1298, 0
        %1305 = vmatprep.subr.bf16.mxu0 0
        %1306 = vmatpush1.bf16.msra.mxu0 %v1303
        %1307 = vmatprep.subr.bf16.mxu0 0
        %1308 = vmatpush1.bf16.msra.mxu0 0
        %1309 = vmatprep.subr.bf16.mxu0 0
        %1310 = vmatpush1.bf16.msra.mxu0 0
        %1311 = vmatprep.subr.bf16.mxu0 0
        %1312 = vmatpush1.bf16.msra.mxu0 0
        %1313 = vmatprep.subr.bf16.mxu0 0
        %1314 = vmatpush1.bf16.msra.mxu0 0
        %1315 = vmatprep.subr.bf16.mxu0 0
        %1316 = vmatpush1.bf16.msra.mxu0 0
        %1317 = vmatprep.subr.bf16.mxu0 0
        %1318 = vmatpush1.bf16.msra.mxu0 0
        %1319 = vmatprep.subr.bf16.mxu0 0
        %1320 = vmatpush1.bf16.msra.mxu0 0
        %1321 = vmatprep.subr.bf16.mxu0 0
        %1322 = vmatpush1.bf16.msra.mxu0 0
        %1323 = vmatprep.subr.bf16.mxu0 0
        %1324 = vmatpush1.bf16.msra.mxu0 0
        %1325 = vmatprep.subr.bf16.mxu0 0
        %1326 = vmatpush1.bf16.msra.mxu0 0
        %1327 = vmatprep.subr.bf16.mxu0 0
        %1328 = vmatpush1.bf16.msra.mxu0 0
        %1329 = vmatprep.subr.bf16.mxu0 0
        %1330 = vmatpush1.bf16.msra.mxu0 0
        %1331 = vmatprep.subr.bf16.mxu0 0
        %1332 = vmatpush1.bf16.msra.mxu0 0
        %1333 = vmatprep.subr.bf16.mxu0 0
        %1334 = vmatpush1.bf16.msra.mxu0 0
        %1335 = vmatprep.subr.bf16.mxu0 0
        %1336 = vmatpush1.bf16.msra.mxu0 0
        %1337 = vmatprep.mubr.bf16.mxu0 0
        %1338 = vmatmul.mubr.bf16.gmra.mrb[0].mxu0 %v1300
        %v1339 = vpop.f32.mrb[0].mxu0
        %v1340 = vadd.f32 0.0, %v1339
        %v1341 = vpop.f32.mrb[0].mxu0
        %v1342 = vpop.f32.mrb[0].mxu0
        %v1343 = vpop.f32.mrb[0].mxu0
        %1344 = vdwg.mxu0
        %v1346 = vsel %vm907, %v1015, 0
        %v1349 = vsel %vm971, %v1016, 0
        %1351 = vmatprep.subr.bf16.mxu0 0
        %1352 = vmatpush1.bf16.msra.mxu0 %v1349
        %1353 = vmatprep.subr.bf16.mxu0 0
        %1354 = vmatpush1.bf16.msra.mxu0 0
        %1355 = vmatprep.subr.bf16.mxu0 0
        %1356 = vmatpush1.bf16.msra.mxu0 0
        %1357 = vmatprep.subr.bf16.mxu0 0
        %1358 = vmatpush1.bf16.msra.mxu0 0
        %1359 = vmatprep.subr.bf16.mxu0 0
        %1360 = vmatpush1.bf16.msra.mxu0 0
        %1361 = vmatprep.subr.bf16.mxu0 0
        %1362 = vmatpush1.bf16.msra.mxu0 0
        %1363 = vmatprep.subr.bf16.mxu0 0
        %1364 = vmatpush1.bf16.msra.mxu0 0
        %1365 = vmatprep.subr.bf16.mxu0 0
        %1366 = vmatpush1.bf16.msra.mxu0 0
        %1367 = vmatprep.subr.bf16.mxu0 0
        %1368 = vmatpush1.bf16.msra.mxu0 0
        %1369 = vmatprep.subr.bf16.mxu0 0
        %1370 = vmatpush1.bf16.msra.mxu0 0
        %1371 = vmatprep.subr.bf16.mxu0 0
        %1372 = vmatpush1.bf16.msra.mxu0 0
        %1373 = vmatprep.subr.bf16.mxu0 0
        %1374 = vmatpush1.bf16.msra.mxu0 0
        %1375 = vmatprep.subr.bf16.mxu0 0
        %1376 = vmatpush1.bf16.msra.mxu0 0
        %1377 = vmatprep.subr.bf16.mxu0 0
        %1378 = vmatpush1.bf16.msra.mxu0 0
        %1379 = vmatprep.subr.bf16.mxu0 0
        %1380 = vmatpush1.bf16.msra.mxu0 0
        %1381 = vmatprep.subr.bf16.mxu0 0
        %1382 = vmatpush1.bf16.msra.mxu0 0
        %1383 = vmatprep.mubr.bf16.mxu0 0
        %1384 = vmatmul.mubr.bf16.gmra.mrb[0].mxu0 %v1346
        %v1385 = vpop.f32.mrb[0].mxu0
        %v1386 = vadd.f32 %v1340, %v1385
        %v1387 = vpop.f32.mrb[0].mxu0
        %v1388 = vpop.f32.mrb[0].mxu0
        %v1389 = vpop.f32.mrb[0].mxu0
        %1390 = vdwg.mxu0
        %s1391 = scalar_lea.vmem %s652, 32
        %v1392 = vld [vmem:[%s1391] sm:$0xf]
        %v1393 = vld [vmem:[%s1391 + $0x4] sm:$0xf]
        %v1394 = vld [vmem:[%s1391 + $0x8] sm:$0xf]
        %v1395 = vld [vmem:[%s1391 + $0xc] sm:$0xf]
        %v1400 = vunpack.c.l.b16 %v1392
        %v1401 = vunpack.c.l.b16 %v1393
        %v1402 = vunpack.c.l.b16 %v1394
        %v1403 = vunpack.c.l.b16 %v1395
        %v1404 = vpack.c.b16 %v1401, %v1400
        %v1405 = vpack.c.b16 %v1403, %v1402
        %1408 = vmatprep.subr.bf16.mxu0 0
        %1409 = vmatpush1.bf16.msra.mxu0 %v1404
        %1410 = vmatprep.subr.bf16.mxu0 0
        %1411 = vmatpush1.bf16.msra.mxu0 %v1405
        %1412 = vmatprep.subr.bf16.mxu0 0
        %1413 = vmatpush1.bf16.msra.mxu0 0
        %1414 = vmatprep.subr.bf16.mxu0 0
        %1415 = vmatpush1.bf16.msra.mxu0 0
        %1416 = vmatprep.subr.bf16.mxu0 0
        %1417 = vmatpush1.bf16.msra.mxu0 0
        %1418 = vmatprep.subr.bf16.mxu0 0
        %1419 = vmatpush1.bf16.msra.mxu0 0
        %1420 = vmatprep.subr.bf16.mxu0 0
        %1421 = vmatpush1.bf16.msra.mxu0 0
        %1422 = vmatprep.subr.bf16.mxu0 0
        %1423 = vmatpush1.bf16.msra.mxu0 0
        %1424 = vmatprep.subr.bf16.mxu0 0
        %1425 = vmatpush1.bf16.msra.mxu0 0
        %1426 = vmatprep.subr.bf16.mxu0 0
        %1427 = vmatpush1.bf16.msra.mxu0 0
        %1428 = vmatprep.subr.bf16.mxu0 0
        %1429 = vmatpush1.bf16.msra.mxu0 0
        %1430 = vmatprep.subr.bf16.mxu0 0
        %1431 = vmatpush1.bf16.msra.mxu0 0
        %1432 = vmatprep.subr.bf16.mxu0 0
        %1433 = vmatpush1.bf16.msra.mxu0 0
        %1434 = vmatprep.subr.bf16.mxu0 0
        %1435 = vmatpush1.bf16.msra.mxu0 0
        %1436 = vmatprep.subr.bf16.mxu0 0
        %1437 = vmatpush1.bf16.msra.mxu0 0
        %1438 = vmatprep.subr.bf16.mxu0 0
        %1439 = vmatpush1.bf16.msra.mxu0 0
        %1440 = vmatprep.mubr.bf16.mxu0 0
        %1441 = vmatmul.mubr.bf16.gmra.mrb[0].mxu0 %v751
        %v1442 = vpop.f32.mrb[0].mxu0
        %v1443 = vadd.f32 0.0, %v1442
        %v1444 = vpop.f32.mrb[0].mxu0
        %v1445 = vpop.f32.mrb[0].mxu0
        %v1446 = vpop.f32.mrb[0].mxu0
        %1447 = vdwg.mxu0
        %s1448 = scalar_lea.vmem %s657, 32
        %v1449 = vld [vmem:[%s1448] sm:$0xf]
        %v1450 = vld [vmem:[%s1448 + $0x4] sm:$0xf]
        %v1451 = vld [vmem:[%s1448 + $0x8] sm:$0xf]
        %v1452 = vld [vmem:[%s1448 + $0xc] sm:$0xf]
        %v1457 = vunpack.c.l.b16 %v1449
        %v1458 = vunpack.c.l.b16 %v1450
        %v1459 = vunpack.c.l.b16 %v1451
        %v1460 = vunpack.c.l.b16 %v1452
        %v1461 = vpack.c.b16 %v1458, %v1457
        %v1462 = vpack.c.b16 %v1460, %v1459
        %1465 = vmatprep.subr.bf16.mxu0 0
        %1466 = vmatpush1.bf16.msra.mxu0 %v1461
        %1467 = vmatprep.subr.bf16.mxu0 0
        %1468 = vmatpush1.bf16.msra.mxu0 %v1462
        %1469 = vmatprep.subr.bf16.mxu0 0
        %1470 = vmatpush1.bf16.msra.mxu0 0
        %1471 = vmatprep.subr.bf16.mxu0 0
        %1472 = vmatpush1.bf16.msra.mxu0 0
        %1473 = vmatprep.subr.bf16.mxu0 0
        %1474 = vmatpush1.bf16.msra.mxu0 0
        %1475 = vmatprep.subr.bf16.mxu0 0
        %1476 = vmatpush1.bf16.msra.mxu0 0
        %1477 = vmatprep.subr.bf16.mxu0 0
        %1478 = vmatpush1.bf16.msra.mxu0 0
        %1479 = vmatprep.subr.bf16.mxu0 0
        %1480 = vmatpush1.bf16.msra.mxu0 0
        %1481 = vmatprep.subr.bf16.mxu0 0
        %1482 = vmatpush1.bf16.msra.mxu0 0
        %1483 = vmatprep.subr.bf16.mxu0 0
        %1484 = vmatpush1.bf16.msra.mxu0 0
        %1485 = vmatprep.subr.bf16.mxu0 0
        %1486 = vmatpush1.bf16.msra.mxu0 0
        %1487 = vmatprep.subr.bf16.mxu0 0
        %1488 = vmatpush1.bf16.msra.mxu0 0
        %1489 = vmatprep.subr.bf16.mxu0 0
        %1490 = vmatpush1.bf16.msra.mxu0 0
        %1491 = vmatprep.subr.bf16.mxu0 0
        %1492 = vmatpush1.bf16.msra.mxu0 0
        %1493 = vmatprep.subr.bf16.mxu0 0
        %1494 = vmatpush1.bf16.msra.mxu0 0
        %1495 = vmatprep.subr.bf16.mxu0 0
        %1496 = vmatpush1.bf16.msra.mxu0 0
        %1497 = vmatprep.mubr.bf16.mxu0 0
        %1498 = vmatmul.mubr.bf16.gmra.mrb[0].mxu0 %v751
        %v1499 = vpop.f32.mrb[0].mxu0
        %v1500 = vadd.f32 0.0, %v1499
        %v1501 = vpop.f32.mrb[0].mxu0
        %v1502 = vpop.f32.mrb[0].mxu0
        %v1503 = vpop.f32.mrb[0].mxu0
        %1504 = vdwg.mxu0
        %s1505 = scalar_lea.vmem %s662, 32
        %v1506 = vld [vmem:[%s1505] sm:$0xf]
        %v1507 = vld [vmem:[%s1505 + $0x4] sm:$0xf]
        %v1508 = vld [vmem:[%s1505 + $0x8] sm:$0xf]
        %v1509 = vld [vmem:[%s1505 + $0xc] sm:$0xf]
        %v1514 = vunpack.c.l.b16 %v1506
        %v1515 = vunpack.c.l.b16 %v1507
        %v1516 = vunpack.c.l.b16 %v1508
        %v1517 = vunpack.c.l.b16 %v1509
        %v1518 = vpack.c.b16 %v1515, %v1514
        %v1519 = vpack.c.b16 %v1517, %v1516
        %1522 = vmatprep.subr.bf16.mxu0 0
        %1523 = vmatpush1.bf16.msra.mxu0 %v1518
        %1524 = vmatprep.subr.bf16.mxu0 0
        %1525 = vmatpush1.bf16.msra.mxu0 %v1519
        %1526 = vmatprep.subr.bf16.mxu0 0
        %1527 = vmatpush1.bf16.msra.mxu0 0
        %1528 = vmatprep.subr.bf16.mxu0 0
        %1529 = vmatpush1.bf16.msra.mxu0 0
        %1530 = vmatprep.subr.bf16.mxu0 0
        %1531 = vmatpush1.bf16.msra.mxu0 0
        %1532 = vmatprep.subr.bf16.mxu0 0
        %1533 = vmatpush1.bf16.msra.mxu0 0
        %1534 = vmatprep.subr.bf16.mxu0 0
        %1535 = vmatpush1.bf16.msra.mxu0 0
        %1536 = vmatprep.subr.bf16.mxu0 0
        %1537 = vmatpush1.bf16.msra.mxu0 0
        %1538 = vmatprep.subr.bf16.mxu0 0
        %1539 = vmatpush1.bf16.msra.mxu0 0
        %1540 = vmatprep.subr.bf16.mxu0 0
        %1541 = vmatpush1.bf16.msra.mxu0 0
        %1542 = vmatprep.subr.bf16.mxu0 0
        %1543 = vmatpush1.bf16.msra.mxu0 0
        %1544 = vmatprep.subr.bf16.mxu0 0
        %1545 = vmatpush1.bf16.msra.mxu0 0
        %1546 = vmatprep.subr.bf16.mxu0 0
        %1547 = vmatpush1.bf16.msra.mxu0 0
        %1548 = vmatprep.subr.bf16.mxu0 0
        %1549 = vmatpush1.bf16.msra.mxu0 0
        %1550 = vmatprep.subr.bf16.mxu0 0
        %1551 = vmatpush1.bf16.msra.mxu0 0
        %1552 = vmatprep.subr.bf16.mxu0 0
        %1553 = vmatpush1.bf16.msra.mxu0 0
        %1554 = vmatprep.mubr.bf16.mxu0 0
        %1555 = vmatmul.mubr.bf16.gmra.mrb[0].mxu0 %v751
        %v1556 = vpop.f32.mrb[0].mxu0
        %v1557 = vadd.f32 0.0, %v1556
        %v1558 = vpop.f32.mrb[0].mxu0
        %v1559 = vpop.f32.mrb[0].mxu0
        %v1560 = vpop.f32.mrb[0].mxu0
        %1561 = vdwg.mxu0
        %v1562 = vpack.c.bf16 %v1443, %v1443
        %v1563 = vpack.c.bf16 %v1500, %v1500
        %v1565 = vsel %vm907, %v1562, 0
        %v1568 = vsel %vm907, %v1563, 0
        %1570 = vmatprep.subr.bf16.mxu0 0
        %1571 = vmatpush1.bf16.xpose.msra.mxu0 %v1568
        %1572 = vmatprep.subr.bf16.mxu0 0
        %1573 = vmatpush1.bf16.xpose.msra.mxu0 0
        %1574 = vmatprep.subr.bf16.mxu0 0
        %1575 = vmatpush1.bf16.xpose.msra.mxu0 0
        %1576 = vmatprep.subr.bf16.mxu0 0
        %1577 = vmatpush1.bf16.xpose.msra.mxu0 0
        %1578 = vmatprep.subr.bf16.mxu0 0
        %1579 = vmatpush1.bf16.xpose.msra.mxu0 0
        %1580 = vmatprep.subr.bf16.mxu0 0
        %1581 = vmatpush1.bf16.xpose.msra.mxu0 0
        %1582 = vmatprep.subr.bf16.mxu0 0
        %1583 = vmatpush1.bf16.xpose.msra.mxu0 0
        %1584 = vmatprep.subr.bf16.mxu0 0
        %1585 = vmatpush1.bf16.xpose.msra.mxu0 0
        %1586 = vmatprep.subr.bf16.mxu0 0
        %1587 = vmatpush1.bf16.xpose.msra.mxu0 0
        %1588 = vmatprep.subr.bf16.mxu0 0
        %1589 = vmatpush1.bf16.xpose.msra.mxu0 0
        %1590 = vmatprep.subr.bf16.mxu0 0
        %1591 = vmatpush1.bf16.xpose.msra.mxu0 0
        %1592 = vmatprep.subr.bf16.mxu0 0
        %1593 = vmatpush1.bf16.xpose.msra.mxu0 0
        %1594 = vmatprep.subr.bf16.mxu0 0
        %1595 = vmatpush1.bf16.xpose.msra.mxu0 0
        %1596 = vmatprep.subr.bf16.mxu0 0
        %1597 = vmatpush1.bf16.xpose.msra.mxu0 0
        %1598 = vmatprep.subr.bf16.mxu0 0
        %1599 = vmatpush1.bf16.xpose.msra.mxu0 0
        %1600 = vmatprep.subr.bf16.mxu0 0
        %1601 = vmatpush1.bf16.xpose.msra.mxu0 0
        %1602 = vmatprep.mubr.bf16.mxu0 0
        %1603 = vmatmul.mubr.bf16.gmra.mrb[0].mxu0 %v1565
        %v1604 = vpop.f32.mrb[0].mxu0
        %v1605 = vadd.f32 0.0, %v1604
        %v1606 = vpop.f32.mrb[0].mxu0
        %v1607 = vpop.f32.mrb[0].mxu0
        %v1608 = vpop.f32.mrb[0].mxu0
        %1609 = vdwg.mxu0
        %v1610 = vmul.f32 %v1605, 0.35355338
        %v1611 = vsel %vm907, %v1610, -inf
        %1612 = vmax.xlane.f32.xlu0 %v1611
        %v1613 = vpop.xlane.xlu0 %1612
        %v1614 = vsub.f32 %v1610, %v1613
        %v1615 = vmul.f32 %v1614, 1.442695
        %v1616 = vpow.pop %v1615
        %v1617 = vsel %vm907, %v1616, 0.0
        %1618 = vadd.xlane.f32.xlu0 %v1617
        %v1619 = vpop.xlane.xlu0 %1618
        %v1620 = vrcp.pop %v1619
        %v1621 = vmul.f32 %v1616, %v1620
        %v1622 = vpack.c.bf16 %v1621, %v1621
        %v1623 = vpack.c.bf16 %v1557, %v1557
        %v1625 = vsel %vm907, %v1622, 0
        %v1628 = vsel %vm971, %v1623, 0
        %1630 = vmatprep.subr.bf16.mxu0 0
        %1631 = vmatpush1.bf16.msra.mxu0 %v1628
        %1632 = vmatprep.subr.bf16.mxu0 0
        %1633 = vmatpush1.bf16.msra.mxu0 0
        %1634 = vmatprep.subr.bf16.mxu0 0
        %1635 = vmatpush1.bf16.msra.mxu0 0
        %1636 = vmatprep.subr.bf16.mxu0 0
        %1637 = vmatpush1.bf16.msra.mxu0 0
        %1638 = vmatprep.subr.bf16.mxu0 0
        %1639 = vmatpush1.bf16.msra.mxu0 0
        %1640 = vmatprep.subr.bf16.mxu0 0
        %1641 = vmatpush1.bf16.msra.mxu0 0
        %1642 = vmatprep.subr.bf16.mxu0 0
        %1643 = vmatpush1.bf16.msra.mxu0 0
        %1644 = vmatprep.subr.bf16.mxu0 0
        %1645 = vmatpush1.bf16.msra.mxu0 0
        %1646 = vmatprep.subr.bf16.mxu0 0
        %1647 = vmatpush1.bf16.msra.mxu0 0
        %1648 = vmatprep.subr.bf16.mxu0 0
        %1649 = vmatpush1.bf16.msra.mxu0 0
        %1650 = vmatprep.subr.bf16.mxu0 0
        %1651 = vmatpush1.bf16.msra.mxu0 0
        %1652 = vmatprep.subr.bf16.mxu0 0
        %1653 = vmatpush1.bf16.msra.mxu0 0
        %1654 = vmatprep.subr.bf16.mxu0 0
        %1655 = vmatpush1.bf16.msra.mxu0 0
        %1656 = vmatprep.subr.bf16.mxu0 0
        %1657 = vmatpush1.bf16.msra.mxu0 0
        %1658 = vmatprep.subr.bf16.mxu0 0
        %1659 = vmatpush1.bf16.msra.mxu0 0
        %1660 = vmatprep.subr.bf16.mxu0 0
        %1661 = vmatpush1.bf16.msra.mxu0 0
        %1662 = vmatprep.mubr.bf16.mxu0 0
        %1663 = vmatmul.mubr.bf16.gmra.mrb[0].mxu0 %v1625
        %v1664 = vpop.f32.mrb[0].mxu0
        %v1665 = vadd.f32 0.0, %v1664
        %v1666 = vpop.f32.mrb[0].mxu0
        %v1667 = vpop.f32.mrb[0].mxu0
        %v1668 = vpop.f32.mrb[0].mxu0
        %1669 = vdwg.mxu0
        %v1670 = vpack.c.bf16 %v1665, %v1665
        %s1671 = scalar_lea.vmem %s667, 8
        %v1672 = vld [vmem:[%s1671] sm:$0xf]
        %v1674 = vsel %vm907, %v1670, 0
        %v1677 = vsel %vm971, %v1672, 0
        %1679 = vmatprep.subr.bf16.mxu0 0
        %1680 = vmatpush1.bf16.msra.mxu0 %v1677
        %1681 = vmatprep.subr.bf16.mxu0 0
        %1682 = vmatpush1.bf16.msra.mxu0 0
        %1683 = vmatprep.subr.bf16.mxu0 0
        %1684 = vmatpush1.bf16.msra.mxu0 0
        %1685 = vmatprep.subr.bf16.mxu0 0
        %1686 = vmatpush1.bf16.msra.mxu0 0
        %1687 = vmatprep.subr.bf16.mxu0 0
        %1688 = vmatpush1.bf16.msra.mxu0 0
        %1689 = vmatprep.subr.bf16.mxu0 0
        %1690 = vmatpush1.bf16.msra.mxu0 0
        %1691 = vmatprep.subr.bf16.mxu0 0
        %1692 = vmatpush1.bf16.msra.mxu0 0
        %1693 = vmatprep.subr.bf16.mxu0 0
        %1694 = vmatpush1.bf16.msra.mxu0 0
        %1695 = vmatprep.subr.bf16.mxu0 0
        %1696 = vmatpush1.bf16.msra.mxu0 0
        %1697 = vmatprep.subr.bf16.mxu0 0
        %1698 = vmatpush1.bf16.msra.mxu0 0
        %1699 = vmatprep.subr.bf16.mxu0 0
        %1700 = vmatpush1.bf16.msra.mxu0 0
        %1701 = vmatprep.subr.bf16.mxu0 0
        %1702 = vmatpush1.bf16.msra.mxu0 0
        %1703 = vmatprep.subr.bf16.mxu0 0
        %1704 = vmatpush1.bf16.msra.mxu0 0
        %1705 = vmatprep.subr.bf16.mxu0 0
        %1706 = vmatpush1.bf16.msra.mxu0 0
        %1707 = vmatprep.subr.bf16.mxu0 0
        %1708 = vmatpush1.bf16.msra.mxu0 0
        %1709 = vmatprep.subr.bf16.mxu0 0
        %1710 = vmatpush1.bf16.msra.mxu0 0
        %1711 = vmatprep.mubr.bf16.mxu0 0
        %1712 = vmatmul.mubr.bf16.gmra.mrb[0].mxu0 %v1674
        %v1713 = vpop.f32.mrb[0].mxu0
        %v1714 = vadd.f32 0.0, %v1713
        %v1715 = vpop.f32.mrb[0].mxu0
        %v1716 = vpop.f32.mrb[0].mxu0
        %v1717 = vpop.f32.mrb[0].mxu0
        %1718 = vdwg.mxu0
        %v1719 = vadd.f32 %v1386, %v1714
        %s1720 = scalar_lea.vmem %s652, 48
        %v1721 = vld [vmem:[%s1720] sm:$0xf]
        %v1722 = vld [vmem:[%s1720 + $0x4] sm:$0xf]
        %v1723 = vld [vmem:[%s1720 + $0x8] sm:$0xf]
        %v1724 = vld [vmem:[%s1720 + $0xc] sm:$0xf]
        %v1729 = vunpack.c.l.b16 %v1721
        %v1730 = vunpack.c.l.b16 %v1722
        %v1731 = vunpack.c.l.b16 %v1723
        %v1732 = vunpack.c.l.b16 %v1724
        %v1733 = vpack.c.b16 %v1730, %v1729
        %v1734 = vpack.c.b16 %v1732, %v1731
        %1737 = vmatprep.subr.bf16.mxu0 0
        %1738 = vmatpush1.bf16.msra.mxu0 %v1733
        %1739 = vmatprep.subr.bf16.mxu0 0
        %1740 = vmatpush1.bf16.msra.mxu0 %v1734
        %1741 = vmatprep.subr.bf16.mxu0 0
        %1742 = vmatpush1.bf16.msra.mxu0 0
        %1743 = vmatprep.subr.bf16.mxu0 0
        %1744 = vmatpush1.bf16.msra.mxu0 0
        %1745 = vmatprep.subr.bf16.mxu0 0
        %1746 = vmatpush1.bf16.msra.mxu0 0
        %1747 = vmatprep.subr.bf16.mxu0 0
        %1748 = vmatpush1.bf16.msra.mxu0 0
        %1749 = vmatprep.subr.bf16.mxu0 0
        %1750 = vmatpush1.bf16.msra.mxu0 0
        %1751 = vmatprep.subr.bf16.mxu0 0
        %1752 = vmatpush1.bf16.msra.mxu0 0
        %1753 = vmatprep.subr.bf16.mxu0 0
        %1754 = vmatpush1.bf16.msra.mxu0 0
        %1755 = vmatprep.subr.bf16.mxu0 0
        %1756 = vmatpush1.bf16.msra.mxu0 0
        %1757 = vmatprep.subr.bf16.mxu0 0
        %1758 = vmatpush1.bf16.msra.mxu0 0
        %1759 = vmatprep.subr.bf16.mxu0 0
        %1760 = vmatpush1.bf16.msra.mxu0 0
        %1761 = vmatprep.subr.bf16.mxu0 0
        %1762 = vmatpush1.bf16.msra.mxu0 0
        %1763 = vmatprep.subr.bf16.mxu0 0
        %1764 = vmatpush1.bf16.msra.mxu0 0
        %1765 = vmatprep.subr.bf16.mxu0 0
        %1766 = vmatpush1.bf16.msra.mxu0 0
        %1767 = vmatprep.subr.bf16.mxu0 0
        %1768 = vmatpush1.bf16.msra.mxu0 0
        %1769 = vmatprep.mubr.bf16.mxu0 0
        %1770 = vmatmul.mubr.bf16.gmra.mrb[0].mxu0 %v751
        %v1771 = vpop.f32.mrb[0].mxu0
        %v1772 = vadd.f32 0.0, %v1771
        %v1773 = vpop.f32.mrb[0].mxu0
        %v1774 = vpop.f32.mrb[0].mxu0
        %v1775 = vpop.f32.mrb[0].mxu0
        %1776 = vdwg.mxu0
        %s1777 = scalar_lea.vmem %s657, 48
        %v1778 = vld [vmem:[%s1777] sm:$0xf]
        %v1779 = vld [vmem:[%s1777 + $0x4] sm:$0xf]
        %v1780 = vld [vmem:[%s1777 + $0x8] sm:$0xf]
        %v1781 = vld [vmem:[%s1777 + $0xc] sm:$0xf]
        %v1786 = vunpack.c.l.b16 %v1778
        %v1787 = vunpack.c.l.b16 %v1779
        %v1788 = vunpack.c.l.b16 %v1780
        %v1789 = vunpack.c.l.b16 %v1781
        %v1790 = vpack.c.b16 %v1787, %v1786
        %v1791 = vpack.c.b16 %v1789, %v1788
        %1794 = vmatprep.subr.bf16.mxu0 0
        %1795 = vmatpush1.bf16.msra.mxu0 %v1790
        %1796 = vmatprep.subr.bf16.mxu0 0
        %1797 = vmatpush1.bf16.msra.mxu0 %v1791
        %1798 = vmatprep.subr.bf16.mxu0 0
        %1799 = vmatpush1.bf16.msra.mxu0 0
        %1800 = vmatprep.subr.bf16.mxu0 0
        %1801 = vmatpush1.bf16.msra.mxu0 0
        %1802 = vmatprep.subr.bf16.mxu0 0
        %1803 = vmatpush1.bf16.msra.mxu0 0
        %1804 = vmatprep.subr.bf16.mxu0 0
        %1805 = vmatpush1.bf16.msra.mxu0 0
        %1806 = vmatprep.subr.bf16.mxu0 0
        %1807 = vmatpush1.bf16.msra.mxu0 0
        %1808 = vmatprep.subr.bf16.mxu0 0
        %1809 = vmatpush1.bf16.msra.mxu0 0
        %1810 = vmatprep.subr.bf16.mxu0 0
        %1811 = vmatpush1.bf16.msra.mxu0 0
        %1812 = vmatprep.subr.bf16.mxu0 0
        %1813 = vmatpush1.bf16.msra.mxu0 0
        %1814 = vmatprep.subr.bf16.mxu0 0
        %1815 = vmatpush1.bf16.msra.mxu0 0
        %1816 = vmatprep.subr.bf16.mxu0 0
        %1817 = vmatpush1.bf16.msra.mxu0 0
        %1818 = vmatprep.subr.bf16.mxu0 0
        %1819 = vmatpush1.bf16.msra.mxu0 0
        %1820 = vmatprep.subr.bf16.mxu0 0
        %1821 = vmatpush1.bf16.msra.mxu0 0
        %1822 = vmatprep.subr.bf16.mxu0 0
        %1823 = vmatpush1.bf16.msra.mxu0 0
        %1824 = vmatprep.subr.bf16.mxu0 0
        %1825 = vmatpush1.bf16.msra.mxu0 0
        %1826 = vmatprep.mubr.bf16.mxu0 0
        %1827 = vmatmul.mubr.bf16.gmra.mrb[0].mxu0 %v751
        %v1828 = vpop.f32.mrb[0].mxu0
        %v1829 = vadd.f32 0.0, %v1828
        %v1830 = vpop.f32.mrb[0].mxu0
        %v1831 = vpop.f32.mrb[0].mxu0
        %v1832 = vpop.f32.mrb[0].mxu0
        %1833 = vdwg.mxu0
        %s1834 = scalar_lea.vmem %s662, 48
        %v1835 = vld [vmem:[%s1834] sm:$0xf]
        %v1836 = vld [vmem:[%s1834 + $0x4] sm:$0xf]
        %v1837 = vld [vmem:[%s1834 + $0x8] sm:$0xf]
        %v1838 = vld [vmem:[%s1834 + $0xc] sm:$0xf]
        %v1843 = vunpack.c.l.b16 %v1835
        %v1844 = vunpack.c.l.b16 %v1836
        %v1845 = vunpack.c.l.b16 %v1837
        %v1846 = vunpack.c.l.b16 %v1838
        %v1847 = vpack.c.b16 %v1844, %v1843
        %v1848 = vpack.c.b16 %v1846, %v1845
        %1851 = vmatprep.subr.bf16.mxu0 0
        %1852 = vmatpush1.bf16.msra.mxu0 %v1847
        %1853 = vmatprep.subr.bf16.mxu0 0
        %1854 = vmatpush1.bf16.msra.mxu0 %v1848
        %1855 = vmatprep.subr.bf16.mxu0 0
        %1856 = vmatpush1.bf16.msra.mxu0 0
        %1857 = vmatprep.subr.bf16.mxu0 0
        %1858 = vmatpush1.bf16.msra.mxu0 0
        %1859 = vmatprep.subr.bf16.mxu0 0
        %1860 = vmatpush1.bf16.msra.mxu0 0
        %1861 = vmatprep.subr.bf16.mxu0 0
        %1862 = vmatpush1.bf16.msra.mxu0 0
        %1863 = vmatprep.subr.bf16.mxu0 0
        %1864 = vmatpush1.bf16.msra.mxu0 0
        %1865 = vmatprep.subr.bf16.mxu0 0
        %1866 = vmatpush1.bf16.msra.mxu0 0
        %1867 = vmatprep.subr.bf16.mxu0 0
        %1868 = vmatpush1.bf16.msra.mxu0 0
        %1869 = vmatprep.subr.bf16.mxu0 0
        %1870 = vmatpush1.bf16.msra.mxu0 0
        %1871 = vmatprep.subr.bf16.mxu0 0
        %1872 = vmatpush1.bf16.msra.mxu0 0
        %1873 = vmatprep.subr.bf16.mxu0 0
        %1874 = vmatpush1.bf16.msra.mxu0 0
        %1875 = vmatprep.subr.bf16.mxu0 0
        %1876 = vmatpush1.bf16.msra.mxu0 0
        %1877 = vmatprep.subr.bf16.mxu0 0
        %1878 = vmatpush1.bf16.msra.mxu0 0
        %1879 = vmatprep.subr.bf16.mxu0 0
        %1880 = vmatpush1.bf16.msra.mxu0 0
        %1881 = vmatprep.subr.bf16.mxu0 0
        %1882 = vmatpush1.bf16.msra.mxu0 0
        %1883 = vmatprep.mubr.bf16.mxu0 0
        %1884 = vmatmul.mubr.bf16.gmra.mrb[0].mxu0 %v751
        %v1885 = vpop.f32.mrb[0].mxu0
        %v1886 = vadd.f32 0.0, %v1885
        %v1887 = vpop.f32.mrb[0].mxu0
        %v1888 = vpop.f32.mrb[0].mxu0
        %v1889 = vpop.f32.mrb[0].mxu0
        %1890 = vdwg.mxu0
        %v1891 = vpack.c.bf16 %v1772, %v1772
        %v1892 = vpack.c.bf16 %v1829, %v1829
        %v1894 = vsel %vm907, %v1891, 0
        %v1897 = vsel %vm907, %v1892, 0
        %1899 = vmatprep.subr.bf16.mxu0 0
        %1900 = vmatpush1.bf16.xpose.msra.mxu0 %v1897
        %1901 = vmatprep.subr.bf16.mxu0 0
        %1902 = vmatpush1.bf16.xpose.msra.mxu0 0
        %1903 = vmatprep.subr.bf16.mxu0 0
        %1904 = vmatpush1.bf16.xpose.msra.mxu0 0
        %1905 = vmatprep.subr.bf16.mxu0 0
        %1906 = vmatpush1.bf16.xpose.msra.mxu0 0
        %1907 = vmatprep.subr.bf16.mxu0 0
        %1908 = vmatpush1.bf16.xpose.msra.mxu0 0
        %1909 = vmatprep.subr.bf16.mxu0 0
        %1910 = vmatpush1.bf16.xpose.msra.mxu0 0
        %1911 = vmatprep.subr.bf16.mxu0 0
        %1912 = vmatpush1.bf16.xpose.msra.mxu0 0
        %1913 = vmatprep.subr.bf16.mxu0 0
        %1914 = vmatpush1.bf16.xpose.msra.mxu0 0
        %1915 = vmatprep.subr.bf16.mxu0 0
        %1916 = vmatpush1.bf16.xpose.msra.mxu0 0
        %1917 = vmatprep.subr.bf16.mxu0 0
        %1918 = vmatpush1.bf16.xpose.msra.mxu0 0
        %1919 = vmatprep.subr.bf16.mxu0 0
        %1920 = vmatpush1.bf16.xpose.msra.mxu0 0
        %1921 = vmatprep.subr.bf16.mxu0 0
        %1922 = vmatpush1.bf16.xpose.msra.mxu0 0
        %1923 = vmatprep.subr.bf16.mxu0 0
        %1924 = vmatpush1.bf16.xpose.msra.mxu0 0
        %1925 = vmatprep.subr.bf16.mxu0 0
        %1926 = vmatpush1.bf16.xpose.msra.mxu0 0
        %1927 = vmatprep.subr.bf16.mxu0 0
        %1928 = vmatpush1.bf16.xpose.msra.mxu0 0
        %1929 = vmatprep.subr.bf16.mxu0 0
        %1930 = vmatpush1.bf16.xpose.msra.mxu0 0
        %1931 = vmatprep.mubr.bf16.mxu0 0
        %1932 = vmatmul.mubr.bf16.gmra.mrb[0].mxu0 %v1894
        %v1933 = vpop.f32.mrb[0].mxu0
        %v1934 = vadd.f32 0.0, %v1933
        %v1935 = vpop.f32.mrb[0].mxu0
        %v1936 = vpop.f32.mrb[0].mxu0
        %v1937 = vpop.f32.mrb[0].mxu0
        %1938 = vdwg.mxu0
        %v1939 = vmul.f32 %v1934, 0.35355338
        %v1940 = vsel %vm907, %v1939, -inf
        %1941 = vmax.xlane.f32.xlu0 %v1940
        %v1942 = vpop.xlane.xlu0 %1941
        %v1943 = vsub.f32 %v1939, %v1942
        %v1944 = vmul.f32 %v1943, 1.442695
        %v1945 = vpow.pop %v1944
        %v1946 = vsel %vm907, %v1945, 0.0
        %1947 = vadd.xlane.f32.xlu0 %v1946
        %v1948 = vpop.xlane.xlu0 %1947
        %v1949 = vrcp.pop %v1948
        %v1950 = vmul.f32 %v1945, %v1949
        %v1951 = vpack.c.bf16 %v1950, %v1950
        %v1952 = vpack.c.bf16 %v1886, %v1886
        %v1954 = vsel %vm907, %v1951, 0
        %v1957 = vsel %vm971, %v1952, 0
        %1959 = vmatprep.subr.bf16.mxu0 0
        %1960 = vmatpush1.bf16.msra.mxu0 %v1957
        %1961 = vmatprep.subr.bf16.mxu0 0
        %1962 = vmatpush1.bf16.msra.mxu0 0
        %1963 = vmatprep.subr.bf16.mxu0 0
        %1964 = vmatpush1.bf16.msra.mxu0 0
        %1965 = vmatprep.subr.bf16.mxu0 0
        %1966 = vmatpush1.bf16.msra.mxu0 0
        %1967 = vmatprep.subr.bf16.mxu0 0
        %1968 = vmatpush1.bf16.msra.mxu0 0
        %1969 = vmatprep.subr.bf16.mxu0 0
        %1970 = vmatpush1.bf16.msra.mxu0 0
        %1971 = vmatprep.subr.bf16.mxu0 0
        %1972 = vmatpush1.bf16.msra.mxu0 0
        %1973 = vmatprep.subr.bf16.mxu0 0
        %1974 = vmatpush1.bf16.msra.mxu0 0
        %1975 = vmatprep.subr.bf16.mxu0 0
        %1976 = vmatpush1.bf16.msra.mxu0 0
        %1977 = vmatprep.subr.bf16.mxu0 0
        %1978 = vmatpush1.bf16.msra.mxu0 0
        %1979 = vmatprep.subr.bf16.mxu0 0
        %1980 = vmatpush1.bf16.msra.mxu0 0
        %1981 = vmatprep.subr.bf16.mxu0 0
        %1982 = vmatpush1.bf16.msra.mxu0 0
        %1983 = vmatprep.subr.bf16.mxu0 0
        %1984 = vmatpush1.bf16.msra.mxu0 0
        %1985 = vmatprep.subr.bf16.mxu0 0
        %1986 = vmatpush1.bf16.msra.mxu0 0
        %1987 = vmatprep.subr.bf16.mxu0 0
        %1988 = vmatpush1.bf16.msra.mxu0 0
        %1989 = vmatprep.subr.bf16.mxu0 0
        %1990 = vmatpush1.bf16.msra.mxu0 0
        %1991 = vmatprep.mubr.bf16.mxu0 0
        %1992 = vmatmul.mubr.bf16.gmra.mrb[0].mxu0 %v1954
        %v1993 = vpop.f32.mrb[0].mxu0
        %v1994 = vadd.f32 0.0, %v1993
        %v1995 = vpop.f32.mrb[0].mxu0
        %v1996 = vpop.f32.mrb[0].mxu0
        %v1997 = vpop.f32.mrb[0].mxu0
        %1998 = vdwg.mxu0
        %v1999 = vpack.c.bf16 %v1994, %v1994
        %s2000 = scalar_lea.vmem %s667, 12
        %v2001 = vld [vmem:[%s2000] sm:$0xf]
        %v2003 = vsel %vm907, %v1999, 0
        %v2006 = vsel %vm971, %v2001, 0
        %2008 = vmatprep.subr.bf16.mxu0 0
        %2009 = vmatpush1.bf16.msra.mxu0 %v2006
        %2010 = vmatprep.subr.bf16.mxu0 0
        %2011 = vmatpush1.bf16.msra.mxu0 0
        %2012 = vmatprep.subr.bf16.mxu0 0
        %2013 = vmatpush1.bf16.msra.mxu0 0
        %2014 = vmatprep.subr.bf16.mxu0 0
        %2015 = vmatpush1.bf16.msra.mxu0 0
        %2016 = vmatprep.subr.bf16.mxu0 0
        %2017 = vmatpush1.bf16.msra.mxu0 0
        %2018 = vmatprep.subr.bf16.mxu0 0
        %2019 = vmatpush1.bf16.msra.mxu0 0
        %2020 = vmatprep.subr.bf16.mxu0 0
        %2021 = vmatpush1.bf16.msra.mxu0 0
        %2022 = vmatprep.subr.bf16.mxu0 0
        %2023 = vmatpush1.bf16.msra.mxu0 0
        %2024 = vmatprep.subr.bf16.mxu0 0
        %2025 = vmatpush1.bf16.msra.mxu0 0
        %2026 = vmatprep.subr.bf16.mxu0 0
        %2027 = vmatpush1.bf16.msra.mxu0 0
        %2028 = vmatprep.subr.bf16.mxu0 0
        %2029 = vmatpush1.bf16.msra.mxu0 0
        %2030 = vmatprep.subr.bf16.mxu0 0
        %2031 = vmatpush1.bf16.msra.mxu0 0
        %2032 = vmatprep.subr.bf16.mxu0 0
        %2033 = vmatpush1.bf16.msra.mxu0 0
        %2034 = vmatprep.subr.bf16.mxu0 0
        %2035 = vmatpush1.bf16.msra.mxu0 0
        %2036 = vmatprep.subr.bf16.mxu0 0
        %2037 = vmatpush1.bf16.msra.mxu0 0
        %2038 = vmatprep.subr.bf16.mxu0 0
        %2039 = vmatpush1.bf16.msra.mxu0 0
        %2040 = vmatprep.mubr.bf16.mxu0 0
        %2041 = vmatmul.mubr.bf16.gmra.mrb[0].mxu0 %v2003
        %v2042 = vpop.f32.mrb[0].mxu0
        %v2043 = vadd.f32 0.0, %v2042
        %v2044 = vpop.f32.mrb[0].mxu0
        %v2045 = vpop.f32.mrb[0].mxu0
        %v2046 = vpop.f32.mrb[0].mxu0
        %2047 = vdwg.mxu0
        %v2048 = vadd.f32 %v1719, %v2043
        %v2049 = vadd.f32 %v701, %v2048
        %v2050 = vld [vmem:[%s670] sm:$0x1]
        %v2052 = vlaneseq
        %v2053 = vshrl.u32 %v2052, 7
        %v2054 = vsub.s32 0, %v2053
        %v2055 = vrot.slane %v2050, %v2054
        %v2057 = vadd.f32 %v2049, %v2055
        %v2058 = vld [vmem:[%s673] sm:$0x1]
        %v2059 = vld [vmem:[%s676] sm:$0x1]
        %v2060 = vsel %vm704, %v2057, 0.0
        %2061 = vadd.xlane.f32.xlu0 %v2060
        %v2062 = vpop.xlane.xlu0 %2061
        %v2063 = vmul.f32 %v2062, %v708
        %v2064 = vsub.f32 %v2057, %v2063
        %v2065 = vmul.f32 %v2064, %v2064
        %v2066 = vsel %vm704, %v2065, 0.0
        %2067 = vadd.xlane.f32.xlu0 %v2066
        %v2068 = vpop.xlane.xlu0 %2067
        %v2069 = vmul.f32 %v2068, %v708
        %v2070 = vadd.f32 %v2069, 1e-05
        %v2071 = vrsqrt.pop %v2070
        %v2072 = vmul.f32 %v2064, %v2071
        %v2074 = vlaneseq
        %v2075 = vshrl.u32 %v2074, 7
        %v2076 = vsub.s32 0, %v2075
        %v2077 = vrot.slane %v2058, %v2076
        %v2079 = vmul.f32 %v2072, %v2077
        %v2081 = vlaneseq
        %v2082 = vshrl.u32 %v2081, 7
        %v2083 = vsub.s32 0, %v2082
        %v2084 = vrot.slane %v2059, %v2083
        %v2086 = vadd.f32 %v2079, %v2084
        %v2087 = vpack.c.bf16 %v2086, %v2086
        %v2088 = vld [vmem:[%s681] sm:$0xf]
        %v2089 = vld [vmem:[%s681 + $0x4] sm:$0xf]
        %v2090 = vld [vmem:[%s681 + $0x8] sm:$0xf]
        %v2091 = vld [vmem:[%s681 + $0xc] sm:$0xf]
        %v2092 = vld [vmem:[%s684] sm:$0x1]
        %v2094 = vlaneseq
        %v2095 = vshrl.u32 %v2094, 7
        %v2096 = vsub.s32 0, %v2095
        %v2097 = vrot.slane %v2092, %v2096
        %v2103 = vunpack.c.l.b16 %v2088
        %v2104 = vunpack.c.l.b16 %v2089
        %v2105 = vunpack.c.l.b16 %v2090
        %v2106 = vunpack.c.l.b16 %v2091
        %v2107 = vpack.c.b16 %v2104, %v2103
        %v2108 = vpack.c.b16 %v2106, %v2105
        %v2112 = vsel %vm704, %v2087, 0
        %2114 = vmatprep.subr.bf16.mxu0 0
        %2115 = vmatpush1.bf16.msra.mxu0 %v2107
        %2116 = vmatprep.subr.bf16.mxu0 0
        %2117 = vmatpush1.bf16.msra.mxu0 %v2108
        %2118 = vmatprep.subr.bf16.mxu0 0
        %2119 = vmatpush1.bf16.msra.mxu0 0
        %2120 = vmatprep.subr.bf16.mxu0 0
        %2121 = vmatpush1.bf16.msra.mxu0 0
        %2122 = vmatprep.subr.bf16.mxu0 0
        %2123 = vmatpush1.bf16.msra.mxu0 0
        %2124 = vmatprep.subr.bf16.mxu0 0
        %2125 = vmatpush1.bf16.msra.mxu0 0
        %2126 = vmatprep.subr.bf16.mxu0 0
        %2127 = vmatpush1.bf16.msra.mxu0 0
        %2128 = vmatprep.subr.bf16.mxu0 0
        %2129 = vmatpush1.bf16.msra.mxu0 0
        %2130 = vmatprep.subr.bf16.mxu0 0
        %2131 = vmatpush1.bf16.msra.mxu0 0
        %2132 = vmatprep.subr.bf16.mxu0 0
        %2133 = vmatpush1.bf16.msra.mxu0 0
        %2134 = vmatprep.subr.bf16.mxu0 0
        %2135 = vmatpush1.bf16.msra.mxu0 0
        %2136 = vmatprep.subr.bf16.mxu0 0
        %2137 = vmatpush1.bf16.msra.mxu0 0
        %2138 = vmatprep.subr.bf16.mxu0 0
        %2139 = vmatpush1.bf16.msra.mxu0 0
        %2140 = vmatprep.subr.bf16.mxu0 0
        %2141 = vmatpush1.bf16.msra.mxu0 0
        %2142 = vmatprep.subr.bf16.mxu0 0
        %2143 = vmatpush1.bf16.msra.mxu0 0
        %2144 = vmatprep.subr.bf16.mxu0 0
        %2145 = vmatpush1.bf16.msra.mxu0 0
        %2146 = vmatprep.mubr.bf16.mxu0 0
        %2147 = vmatmul.mubr.bf16.gmra.mrb[0].mxu0 %v2112
        %v2148 = vpop.f32.mrb[0].mxu0
        %v2149 = vadd.f32 %v2097, %v2148
        %v2150 = vpop.f32.mrb[0].mxu0
        %v2151 = vpop.f32.mrb[0].mxu0
        %v2152 = vpop.f32.mrb[0].mxu0
        %2153 = vdwg.mxu0
        %v2154 = vmul.f32 %v2149, 0.5
        %v2155 = vmul.f32 %v2149, 0.70710677
        %v2156 = verf.f32.pop %v2155
        %v2157 = vadd.f32 %v2156, 1.0
        %v2158 = vmul.f32 %v2154, %v2157
        %v2159 = vpack.c.bf16 %v2158, %v2158
        %v2160 = vld [vmem:[%s689] sm:$0xf]
        %v2161 = vld [vmem:[%s689 + $0x4] sm:$0xf]
        %v2162 = vld [vmem:[%s689 + $0x8] sm:$0xf]
        %v2163 = vld [vmem:[%s689 + $0xc] sm:$0xf]
        %v2164 = vld [vmem:[%s689 + $0x10] sm:$0xf]
        %v2165 = vld [vmem:[%s689 + $0x14] sm:$0xf]
        %v2166 = vld [vmem:[%s689 + $0x18] sm:$0xf]
        %v2167 = vld [vmem:[%s689 + $0x1c] sm:$0xf]
        %v2176 = vunpack.c.l.b16 %v2160
        %v2177 = vunpack.c.l.b16 %v2161
        %v2178 = vunpack.c.l.b16 %v2162
        %v2179 = vunpack.c.l.b16 %v2163
        %v2180 = vunpack.c.l.b16 %v2164
        %v2181 = vunpack.c.l.b16 %v2165
        %v2182 = vunpack.c.l.b16 %v2166
        %v2183 = vunpack.c.l.b16 %v2167
        %v2184 = vpack.c.b16 %v2177, %v2176
        %v2185 = vpack.c.b16 %v2179, %v2178
        %v2186 = vpack.c.b16 %v2181, %v2180
        %v2187 = vpack.c.b16 %v2183, %v2182
        %vm2192 = vcmask 523264
        %v2194 = vsel %vm2192, %v2159, 0
        %2196 = vmatprep.subr.bf16.mxu0 0
        %2197 = vmatpush1.bf16.msra.mxu0 %v2184
        %2198 = vmatprep.subr.bf16.mxu0 0
        %2199 = vmatpush1.bf16.msra.mxu0 %v2185
        %2200 = vmatprep.subr.bf16.mxu0 0
        %2201 = vmatpush1.bf16.msra.mxu0 %v2186
        %2202 = vmatprep.subr.bf16.mxu0 0
        %2203 = vmatpush1.bf16.msra.mxu0 %v2187
        %2204 = vmatprep.subr.bf16.mxu0 0
        %2205 = vmatpush1.bf16.msra.mxu0 0
        %2206 = vmatprep.subr.bf16.mxu0 0
        %2207 = vmatpush1.bf16.msra.mxu0 0
        %2208 = vmatprep.subr.bf16.mxu0 0
        %2209 = vmatpush1.bf16.msra.mxu0 0
        %2210 = vmatprep.subr.bf16.mxu0 0
        %2211 = vmatpush1.bf16.msra.mxu0 0
        %2212 = vmatprep.subr.bf16.mxu0 0
        %2213 = vmatpush1.bf16.msra.mxu0 0
        %2214 = vmatprep.subr.bf16.mxu0 0
        %2215 = vmatpush1.bf16.msra.mxu0 0
        %2216 = vmatprep.subr.bf16.mxu0 0
        %2217 = vmatpush1.bf16.msra.mxu0 0
        %2218 = vmatprep.subr.bf16.mxu0 0
        %2219 = vmatpush1.bf16.msra.mxu0 0
        %2220 = vmatprep.subr.bf16.mxu0 0
        %2221 = vmatpush1.bf16.msra.mxu0 0
        %2222 = vmatprep.subr.bf16.mxu0 0
        %2223 = vmatpush1.bf16.msra.mxu0 0
        %2224 = vmatprep.subr.bf16.mxu0 0
        %2225 = vmatpush1.bf16.msra.mxu0 0
        %2226 = vmatprep.subr.bf16.mxu0 0
        %2227 = vmatpush1.bf16.msra.mxu0 0
        %2228 = vmatprep.mubr.bf16.mxu0 0
        %2229 = vmatmul.mubr.bf16.gmra.mrb[0].mxu0 %v2194
        %v2230 = vpop.f32.mrb[0].mxu0
        %v2231 = vadd.f32 0.0, %v2230
        %v2232 = vpop.f32.mrb[0].mxu0
        %v2233 = vpop.f32.mrb[0].mxu0
        %v2234 = vpop.f32.mrb[0].mxu0
        %2235 = vdwg.mxu0
        %v2236 = vadd.f32 %v2057, %v2231
        %v2237 = vld [vmem:[%s692] sm:$0x1]
        %v2239 = vlaneseq
        %v2240 = vshrl.u32 %v2239, 7
        %v2241 = vsub.s32 0, %v2240
        %v2242 = vrot.slane %v2237, %v2241
        %v2244 = vadd.f32 %v2236, %v2242
        %2245 = vst.msk [vmem:[#allocation2] sm:$0xff] %vm704, %v2244
        %p2246 = scmp.eq.s32.totalorder %s33, 1
        // Predicated region
        $region81: #{tpu_custom_call.1} parent=75 // pred_check
          %p2247 = pneg %p2246
        $region82: #{tpu_custom_call.1} parent=75 // pred_check_branch
          %2249 = sbr.rel (%p2247) target = $region84
        $region83: #{tpu_custom_call.1} parent=75 // pred_region
          %2250 = vst.msk [vmem:[%s637] sm:$0xff] %vm704, %v2244
        $region84: #{tpu_custom_call.1} parent=75 // pred_fallthru
          _
        %s2251 = sand.u32 %s412, 1
        %s2252 = scalar_lea.sflag [#allocation4], %s2251
        %s2253 = sand.u32 %s412, 1
        %s2254 = smul.addr %s2253, 8
        %s2255 = scalar_lea.vmem [#allocation3], %s2254
        // Predicated region
        $region85: #{tpu_custom_call.1} parent=75 // pred_check
          %p2256 = pneg %p422
        $region86: #{tpu_custom_call.1} parent=75 // pred_check_branch
          %2258 = sbr.rel (%p2256) target = $region88
        $region87: #{tpu_custom_call.1} parent=75 // pred_region
          %s2260 = ssub.s32 128, 128
          %2261 = vsyncadd %s2252, %s2260
          %s2262 = smul.addr %s32, 128
          %s2263 = scalar_lea.hbm %s14, %s2262
          %s2265 = sshll.u32 %s2255, 4
          %s2266 = int_to_ptr.vmem [resolvable:$true] %s2265
          %2268 = dma.vmem_to_hbm [thread:$0]  %s2266, 128, %s2263, %s2252
        $region88: #{tpu_custom_call.1} parent=75 // pred_fallthru
          _
      $region76: #{tpu_custom_call.1} parent=5 // pred_fallthru
        _
      %p2269 = scmp.le.s32.totalorder 2, %s23
      // Predicated region
      $region89: #{tpu_custom_call.1} parent=5 // pred_check
        %p2270 = pneg %p2269
      $region90: #{tpu_custom_call.1} parent=5 // pred_check_branch
        %2272 = sbr.rel (%p2270) target = $region92
      $region91: #{tpu_custom_call.1} parent=5 // pred_region
        %s2273 = ssub.s32 %s23, 2
        // Predicated region
        $region93: #{tpu_custom_call.1} parent=91 // pred_check
          %p2274 = pneg %p428
        $region94: #{tpu_custom_call.1} parent=91 // pred_check_branch
          %2276 = sbr.rel (%p2274) target = $region96
        $region95: #{tpu_custom_call.1} parent=91 // pred_region
          %s2277 = sand.u32 %s413, 1
          %s2278 = scalar_lea.sflag [#allocation4], %s2277
          %s2279 = sand.u32 %s413, 1
          %s2280 = smul.addr %s2279, 8
          %s2281 = scalar_lea.vmem [#allocation3], %s2280
          %2282 = dma.done %s2278, 128
        $region96: #{tpu_custom_call.1} parent=91 // pred_fallthru
          _
      $region92: #{tpu_custom_call.1} parent=5 // pred_fallthru
        _
    $region6: #{tpu_custom_call.1} parent=1 // loop_footer
      %s27 = sadd.s32 1, %s23
    $region7: #{tpu_custom_call.1} parent=1 // loop_footer_branch
      %22 = sbr.rel target = $region3
    $region8: #{tpu_custom_call.1} parent=1 // loop_exit
      _
    %2283 = vsyncpa [#allocation4], 1
    %s2284 = scalar_lea.sflag [#allocation4], 1
    %2285 = vsyncpa %s2284, 1

</llo_original>
